<compile_context>
chip_gen: v6e
topology: v6e:2x2x1
jax: 0.10.0
libtpu: 0.0.40
codegen_flags: <defaults>
</compile_context>

<pallas_src>
import functools
import numpy as np
import jax
import jax.numpy as jnp
from jax import lax
from jax.experimental import pallas as pl
from jax.experimental.pallas import tpu as pltpu

ACT_NONE, ACT_LRELU, ACT_RELU = 0, 1, 2
OUT_NONE, OUT_TANH = 0, 1


def _round_up(x, m):
    return (x + m - 1) // m * m


def _act(x, act):
    if act == ACT_LRELU:
        return jnp.where(x >= 0, x, 0.2 * x)
    if act == ACT_RELU:
        return jnp.maximum(x, 0.0)
    return x


# ------------------------------ Pallas kernel ---------------------------------
def _gemm_kernel(*refs, n_ops, act_out):
    """refs = (p_0..p_{n-1}, w_0..w_{n-1}, bias, out).

    out_tile = act_out( sum_i p_i @ w_i + bias ).  BN scale/shift + conv bias are
    pre-folded into w_i / bias, so the epilogue is one add (+ optional tanh).
    Operands may be bf16 (MXU); accumulation and epilogue stay f32.
    """
    acc = jnp.dot(refs[0][...], refs[n_ops][...], preferred_element_type=jnp.float32)
    for i in range(1, n_ops):                      # split-K: skip operand, no HBM concat
        acc += jnp.dot(refs[i][...], refs[n_ops + i][...],
                       preferred_element_type=jnp.float32)
    y = acc + refs[2 * n_ops][...]
    if act_out == OUT_TANH:
        y = jnp.tanh(y)
    refs[2 * n_ops + 1][...] = y


def fused_gemm(operands, bias, act_out, compute_dtype=jnp.float32, block_m=1024):
    """act_out(sum_i patches_i @ weight_i + bias), M tiled on a 'parallel' grid axis.

    operands: list of (patches (M, K_i), weight (K_i, N)); N <= 128 is kept UNPADDED
    in HBM (no 128-wide padded columns written / sliced back off).
    """
    M = operands[0][0].shape[0]
    N = operands[0][1].shape[1]
    tm = min(_round_up(M, 8), block_m)             # multiple of 8; sized for <=~32MiB VMEM
    Mp = _round_up(M, tm)
    ps, ws = [], []
    for p, w in operands:
        if Mp != M:
            p = jnp.pad(p, ((0, Mp - M), (0, 0)))
        ps.append(p.astype(compute_dtype))
        ws.append(w.astype(compute_dtype))
    b = bias.reshape(1, N).astype(jnp.float32)

    n_ops = len(operands)
    in_specs = ([pl.BlockSpec((tm, int(p.shape[1])), lambda i: (i, 0)) for p in ps] +
                [pl.BlockSpec((int(w.shape[0]), int(w.shape[1])), lambda i: (0, 0)) for w in ws] +
                [pl.BlockSpec((1, N), lambda i: (0, 0))])
    out = pl.pallas_call(
        functools.partial(_gemm_kernel, n_ops=n_ops, act_out=act_out),
        out_shape=jax.ShapeDtypeStruct((Mp, N), jnp.float32),
        grid=(Mp // tm,),
        in_specs=in_specs,
        out_specs=pl.BlockSpec((tm, N), lambda i: (i, 0)),
        compiler_params=pltpu.CompilerParams(
            dimension_semantics=("parallel",),         # megacore sharding on v7x
            vmem_limit_bytes=32 * 1024 * 1024),
    )(*ps, *ws, b)
    return out if Mp == M else out[:M]


# --------------------------- conv lowering (glue) ------------------------------
def _im2col(x, kh, kw, stride, pad):
    N, H, W, C = x.shape
    xp = jnp.pad(x, ((0, 0), (pad, pad), (pad, pad), (0, 0)))
    Ho = (H + 2 * pad - kh) // stride + 1
    Wo = (W + 2 * pad - kw) // stride + 1
    cols = [xp[:, i:i + (Ho - 1) * stride + 1:stride,
               j:j + (Wo - 1) * stride + 1:stride, :]
            for i in range(kh) for j in range(kw)]
    patches = jnp.stack(cols, axis=3)              # (N, Ho, Wo, kh*kw, C)
    return patches.reshape(N * Ho * Wo, kh * kw * C), (N, Ho, Wo)


def conv2d_down(x, wmat, bias, act_in, compute_dtype):
    """[act_in] -> Conv2d(k4,s2,p1) -> folded BN, via one fused Pallas GEMM."""
    x = _act(x, act_in)                            # once per element, not per patch
    patches, (N, Ho, Wo) = _im2col(x, 4, 4, 2, 1)
    y = fused_gemm([(patches, wmat)], bias, OUT_NONE, compute_dtype)
    return y.reshape(N, Ho, Wo, wmat.shape[1])


def conv_transpose2d_subpixel(xs, wmats, bias4, cout, act_out, compute_dtype):
    """ReLU -> ConvTranspose2d(k4,s2,p1) -> folded BN [-> tanh].

    `xs` is a list of tensors (the eliminated skip concat -> split-K operands).
    Sub-pixel lowering: one 3x3/stride-1/pad-1 conv producing 4*cout phase channels
    on the un-dilated input, then a depth-to-space interleave.
    """
    N, H, W, _ = xs[0].shape
    operands = []
    for x, wmat in zip(xs, wmats):
        p, _ = _im2col(_act(x, ACT_RELU), 3, 3, 1, 1)
        operands.append((p, wmat))
    y = fused_gemm(operands, bias4, act_out, compute_dtype)     # (N*H*W, 4*cout)
    y = y.reshape(N, H, W, 2, 2, cout)                          # (.., rh, rw, co)
    y = jnp.transpose(y, (0, 1, 3, 2, 4, 5)).reshape(N, 2 * H, 2 * W, cout)
    return y


# --------------------- parameter folding / weight packing ----------------------
def _down_gemm_weight(dw, db, dscale, dshift):
    # dw: (Cout, Cin, 4, 4) OIHW.  Fold BN: (x*w + b)*s + t == x*(w*s) + (b*s + t).
    cout, cin, kh, kw = dw.shape
    w = dw * dscale[:, None, None, None]
    b = db * dscale + dshift
    return jnp.transpose(w, (2, 3, 1, 0)).reshape(kh * kw * cin, cout), b


def _up_subpixel_weight(uw, ub, uscale, ushift, split=None):
    """uw: (Cin, Cout, 4, 4) PyTorch ConvTranspose2d layout.

    Builds the 3x3 sub-pixel weight Wc (3,3,Cin,4*Cout): output phase (rh,rw) at spatial
    offset (rh+dh, rw+dw) of the 3x3 window uses original tap W[3-rh-2dh, 3-rw-2dw].
    Returns GEMM weights (optionally K-split along Cin) and the phase-tiled folded bias.
    """
    cin, cout = uw.shape[:2]
    w = uw * uscale[None, :, None, None]
    b4 = jnp.tile(ub * uscale + ushift, 4)
    wc = jnp.zeros((3, 3, cin, 4, cout), uw.dtype)
    for rh in range(2):
        for rw in range(2):
            for dh in range(2):
                for dw_ in range(2):
                    wc = wc.at[rh + dh, rw + dw_, :, rh * 2 + rw, :].set(
                        w[:, :, 3 - rh - 2 * dh, 3 - rw - 2 * dw_])
    if split is None:
        return [wc.reshape(9 * cin, 4 * cout)], b4
    parts, start = [], 0
    for c in split:
        parts.append(wc[:, :, start:start + c].reshape(9 * c, 4 * cout))
        start += c
    return parts, b4


def prepare_inference_params(params, num_downs):
    D = num_downs
    prep = []
    for i in range(1, D + 1):
        p = params[i - 1]
        dmat, dbias = _down_gemm_weight(p["dw"], p["db"], p["dscale"], p["dshift"])
        c_i = p["dw"].shape[0]
        split = None if i == D else (c_i, c_i)       # [skip, upsampled] channel split
        umats, ubias = _up_subpixel_weight(p["uw"], p["ub"], p["uscale"], p["ushift"], split)
        prep.append(dict(dmat=dmat, dbias=dbias, umats=umats, ubias=ubias,
                         ucout=p["uw"].shape[1]))
    return prep


# ------------------------------- parameters ------------------------------------
def _bn_affine(key, n, eps=1e-5):
    k1, k2, k3, k4 = jax.random.split(key, 4)
    gamma = 1.0 + 0.1 * jax.random.normal(k1, (n,), jnp.float32)
    beta = 0.1 * jax.random.normal(k2, (n,), jnp.float32)
    mean = 0.05 * jax.random.normal(k3, (n,), jnp.float32)
    var = 1.0 + 0.1 * jax.random.uniform(k4, (n,), jnp.float32)
    scale = gamma / jnp.sqrt(var + eps)
    return scale, beta - mean * scale


def init_params(key, input_nc, output_nc, num_downs, ngf):
    c = [input_nc] + [min(ngf * (2 ** i), ngf * 8) for i in range(num_downs)]
    D = num_downs
    params = []
    ones = lambda n: jnp.ones((n,), jnp.float32)
    zeros = lambda n: jnp.zeros((n,), jnp.float32)
    for i in range(1, D + 1):
        k = jax.random.fold_in(key, i)
        dw = 0.05 * jax.random.normal(jax.random.fold_in(k, 0), (c[i], c[i - 1], 4, 4), jnp.float32)
        db = zeros(c[i])                               # bias=False with BatchNorm
        if 1 < i < D:
            dscale, dshift = _bn_affine(jax.random.fold_in(k, 1), c[i])
        else:                                          # outermost / innermost: no down norm
            dscale, dshift = ones(c[i]), zeros(c[i])
        up_in = c[D] if i == D else 2 * c[i]
        up_out = output_nc if i == 1 else c[i - 1]
        uw = 0.05 * jax.random.normal(jax.random.fold_in(k, 2), (up_in, up_out, 4, 4), jnp.float32)
        if i == 1:                                     # outermost up: bias, no norm, tanh
            ub = 0.02 * jax.random.normal(jax.random.fold_in(k, 3), (up_out,), jnp.float32)
            uscale, ushift = ones(up_out), zeros(up_out)
        else:
            ub = zeros(up_out)
            uscale, ushift = _bn_affine(jax.random.fold_in(k, 3), up_out)
        params.append(dict(dw=dw, db=db, dscale=dscale, dshift=dshift,
                           uw=uw, ub=ub, uscale=uscale, ushift=ushift))
    return params


# ------------------------------ forward passes ----------------------------------
def render_g_forward(x_nchw, prep, num_downs, compute_dtype=jnp.float32):
    """Pallas-backed Render_G.forward (fp16=False path)."""
    x = jnp.transpose(x_nchw, (0, 2, 3, 1)).astype(jnp.float32)    # NCHW -> NHWC
    D = num_downs
    downs, h = [], x
    for i in range(1, D + 1):
        q = prep[i - 1]
        act = ACT_NONE if i == 1 else ACT_LRELU
        h = conv2d_down(h, q["dmat"], q["dbias"], act, compute_dtype)
        downs.append(h)                                # skips keep the PRE-activation tensor
    ops = [downs[-1]]
    for i in range(D, 0, -1):
        q = prep[i - 1]
        out_act = OUT_TANH if i == 1 else OUT_NONE
        u = conv_transpose2d_subpixel(ops, q["umats"], q["ubias"], q["ucout"],
                                      out_act, compute_dtype)
        if i > 1:
            ops = [downs[i - 2], u]                    # split-K operands replace HBM concat
    return jnp.transpose(u, (0, 3, 1, 2))              # NHWC -> NCHW


def _ref_conv(x, w_oihw, bias, scale, shift, stride, pad, act_in, act_out, lhs_dil=1):
    if act_in == ACT_LRELU:
        x = jnp.where(x >= 0, x, 0.2 * x)
    elif act_in == ACT_RELU:
        x = jnp.maximum(x, 0.0)
    w = jnp.transpose(w_oihw, (2, 3, 1, 0))
    y = lax.conv_general_dilated(x, w, (stride, stride), [(pad, pad), (pad, pad)],
                                 lhs_dilation=(lhs_dil, lhs_dil),
                                 dimension_numbers=("NHWC", "HWIO", "NHWC"),
                                 precision=lax.Precision.HIGHEST)
    y = (y + bias) * scale + shift
    if act_out == OUT_TANH:
        y = jnp.tanh(y)
    return y


def ref_forward(x_nchw, params, num_downs):
    x = jnp.transpose(x_nchw, (0, 2, 3, 1)).astype(jnp.float32)
    D = num_downs
    downs, h = [], x
    for i in range(1, D + 1):
        p = params[i - 1]
        act = ACT_NONE if i == 1 else ACT_LRELU
        h = _ref_conv(h, p["dw"], p["db"], p["dscale"], p["dshift"], 2, 1, act, OUT_NONE)
        downs.append(h)
    u = downs[-1]
    for i in range(D, 0, -1):
        p = params[i - 1]
        out_act = OUT_TANH if i == 1 else OUT_NONE
        w_eq = jnp.transpose(p["uw"][:, :, ::-1, ::-1], (1, 0, 2, 3))
        u = _ref_conv(u, w_eq, p["ub"], p["uscale"], p["ushift"], 1, 2, ACT_RELU, out_act, lhs_dil=2)
        if i > 1:
            u = jnp.concatenate([downs[i - 2], u], axis=-1)
    return jnp.transpose(u, (0, 3, 1, 2))


# ----------------------------------- main ---------------------------------------
if __name__ == "__main__":
    # opt: size='small', use_example=1, n_downsample_G=3, ngf=8, isTrain=False, fp16=False
    B, H, W = 2, 16, 16
    use_example, ext_channel = 1, 0
    input_nc = 3 + 3 * use_example + ext_channel       # = 6
    output_nc, num_downs, ngf = 3, 3, 8

    params = init_params(jax.random.PRNGKey(42), input_nc, output_nc, num_downs, ngf)
    prep = prepare_inference_params(params, num_downs)   # fold BN/bias, pack GEMM weights (once)
    x = jax.random.normal(jax.random.PRNGKey(0), (B, input_nc, H, W), jnp.float32)

    ref = np.asarray(jax.block_until_ready(ref_forward(x, params, num_downs)))

    # f32 MXU operands (exact path)
    fwd_f32 = jax.jit(lambda inp: render_g_forward(inp, prep, num_downs, jnp.float32))
    out_f32 = np.asarray(jax.block_until_ready(fwd_f32(x)))
    assert out_f32.shape == (B, output_nc, H, W), out_f32.shape
    assert out_f32.dtype == np.float32
    assert np.allclose(out_f32, ref, atol=5e-3, rtol=5e-3), \
        float(np.max(np.abs(out_f32 - ref)))

    # bf16 MXU operands (f32 accumulate/epilogue) — memory-bound speed path for v5e/v6e/v7x
    fwd_bf16 = jax.jit(lambda inp: render_g_forward(inp, prep, num_downs, jnp.bfloat16))
    out_bf16 = np.asarray(jax.block_until_ready(fwd_bf16(x)))
    assert np.allclose(out_bf16, ref, atol=2e-2, rtol=2e-2), \
        float(np.max(np.abs(out_bf16 - ref)))

    print("KERNEL_OK")
</pallas_src>

<mosaic_0001>
module attributes {stable_mosaic.version = 11 : i64} {
  func.func @_gemm_kernel(%arg0: i32, %arg1: memref<128x96xf32, #tpu.memory_space<vmem>>, %arg2: memref<96x8xf32, #tpu.memory_space<vmem>>, %arg3: memref<1x8xf32, #tpu.memory_space<vmem>>, %arg4: memref<128x8xf32, #tpu.memory_space<vmem>>) attributes {dimension_semantics = [#tpu.dimension_semantics<parallel>], iteration_bounds = array<i64: 1>, scalar_prefetch = 0 : i64, scratch_operands = 0 : i64, tpu.core_type = #tpu.core_type<tc>, window_params = [{transform_indices = @transform_0, window_bounds = array<i64: 128, 96>}, {pipeline_mode = #tpu.pipeline_mode<synchronous>, transform_indices = @transform_1, window_bounds = array<i64: 96, 8>}, {pipeline_mode = #tpu.pipeline_mode<synchronous>, transform_indices = @transform_2, window_bounds = array<i64: 1, 8>}, {transform_indices = @transform_3, window_bounds = array<i64: 128, 8>}]} {
    %c0 = arith.constant 0 : index
    %c0_0 = arith.constant 0 : index
    %0 = vector.load %arg1[%c0, %c0_0] : memref<128x96xf32, #tpu.memory_space<vmem>>, vector<128x96xf32>
    %c0_1 = arith.constant 0 : index
    %c0_2 = arith.constant 0 : index
    %1 = vector.load %arg2[%c0_1, %c0_2] : memref<96x8xf32, #tpu.memory_space<vmem>>, vector<96x8xf32>
    %cst = arith.constant dense<0.000000e+00> : vector<128x8xf32>
    %2 = tpu.matmul %0, %1, %cst {dimension_numbers = #tpu.dot_dimension_numbers<[1], [0], [0], [1], [0, 0, 1, 1], [], []>} : vector<128x96xf32>, vector<96x8xf32>, vector<128x8xf32> -> vector<128x8xf32>
    %c0_3 = arith.constant 0 : index
    %c0_4 = arith.constant 0 : index
    %3 = vector.load %arg3[%c0_3, %c0_4] : memref<1x8xf32, #tpu.memory_space<vmem>>, vector<1x8xf32>
    %4 = vector.broadcast %3 : vector<1x8xf32> to vector<128x8xf32>
    %5 = arith.addf %2, %4 : vector<128x8xf32>
    %c0_5 = arith.constant 0 : index
    %c0_6 = arith.constant 0 : index
    %6 = vector.load %arg4[%c0_5, %c0_6] : memref<128x8xf32, #tpu.memory_space<vmem>>, vector<128x8xf32>
    tpu.vector_store %arg4[%c0_5, %c0_6], %5 {strides = array<i32>} : memref<128x8xf32, #tpu.memory_space<vmem>>, vector<128x8xf32>,
    return
  }
  func.func @transform_0(%arg0: i32) -> (i32, i32) {
    %c0_i32 = arith.constant 0 : i32
    %c0_i32_0 = arith.constant 0 : i32
    return %arg0, %c0_i32 : i32, i32
  }
  func.func @transform_1(%arg0: i32) -> (i32, i32) {
    %c0_i32 = arith.constant 0 : i32
    %c0_i32_0 = arith.constant 0 : i32
    %c0_i32_1 = arith.constant 0 : i32
    return %c0_i32, %c0_i32_0 : i32, i32
  }
  func.func @transform_2(%arg0: i32) -> (i32, i32) {
    %c0_i32 = arith.constant 0 : i32
    %c0_i32_0 = arith.constant 0 : i32
    %c0_i32_1 = arith.constant 0 : i32
    return %c0_i32, %c0_i32_0 : i32, i32
  }
  func.func @transform_3(%arg0: i32) -> (i32, i32) {
    %c0_i32 = arith.constant 0 : i32
    %c0_i32_0 = arith.constant 0 : i32
    return %arg0, %c0_i32 : i32, i32
  }
}

module attributes {stable_mosaic.version = 11 : i64} {
  func.func @_gemm_kernel(%arg0: i32, %arg1: memref<32x128xf32, #tpu.memory_space<vmem>>, %arg2: memref<128x16xf32, #tpu.memory_space<vmem>>, %arg3: memref<1x16xf32, #tpu.memory_space<vmem>>, %arg4: memref<32x16xf32, #tpu.memory_space<vmem>>) attributes {dimension_semantics = [#tpu.dimension_semantics<parallel>], iteration_bounds = array<i64: 1>, scalar_prefetch = 0 : i64, scratch_operands = 0 : i64, tpu.core_type = #tpu.core_type<tc>, window_params = [{transform_indices = @transform_0, window_bounds = array<i64: 32, 128>}, {pipeline_mode = #tpu.pipeline_mode<synchronous>, transform_indices = @transform_1, window_bounds = array<i64: 128, 16>}, {pipeline_mode = #tpu.pipeline_mode<synchronous>, transform_indices = @transform_2, window_bounds = array<i64: 1, 16>}, {transform_indices = @transform_3, window_bounds = array<i64: 32, 16>}]} {
    %c0 = arith.constant 0 : index
    %c0_0 = arith.constant 0 : index
    %0 = vector.load %arg1[%c0, %c0_0] : memref<32x128xf32, #tpu.memory_space<vmem>>, vector<32x128xf32>
    %c0_1 = arith.constant 0 : index
    %c0_2 = arith.constant 0 : index
    %1 = vector.load %arg2[%c0_1, %c0_2] : memref<128x16xf32, #tpu.memory_space<vmem>>, vector<128x16xf32>
    %cst = arith.constant dense<0.000000e+00> : vector<32x16xf32>
    %2 = tpu.matmul %0, %1, %cst {dimension_numbers = #tpu.dot_dimension_numbers<[1], [0], [0], [1], [0, 0, 1, 1], [], []>} : vector<32x128xf32>, vector<128x16xf32>, vector<32x16xf32> -> vector<32x16xf32>
    %c0_3 = arith.constant 0 : index
    %c0_4 = arith.constant 0 : index
    %3 = vector.load %arg3[%c0_3, %c0_4] : memref<1x16xf32, #tpu.memory_space<vmem>>, vector<1x16xf32>
    %4 = vector.broadcast %3 : vector<1x16xf32> to vector<32x16xf32>
    %5 = arith.addf %2, %4 : vector<32x16xf32>
    %c0_5 = arith.constant 0 : index
    %c0_6 = arith.constant 0 : index
    %6 = vector.load %arg4[%c0_5, %c0_6] : memref<32x16xf32, #tpu.memory_space<vmem>>, vector<32x16xf32>
    tpu.vector_store %arg4[%c0_5, %c0_6], %5 {strides = array<i32>} : memref<32x16xf32, #tpu.memory_space<vmem>>, vector<32x16xf32>,
    return
  }
  func.func @transform_0(%arg0: i32) -> (i32, i32) {
    %c0_i32 = arith.constant 0 : i32
    %c0_i32_0 = arith.constant 0 : i32
    return %arg0, %c0_i32 : i32, i32
  }
  func.func @transform_1(%arg0: i32) -> (i32, i32) {
    %c0_i32 = arith.constant 0 : i32
    %c0_i32_0 = arith.constant 0 : i32
    %c0_i32_1 = arith.constant 0 : i32
    return %c0_i32, %c0_i32_0 : i32, i32
  }
  func.func @transform_2(%arg0: i32) -> (i32, i32) {
    %c0_i32 = arith.constant 0 : i32
    %c0_i32_0 = arith.constant 0 : i32
    %c0_i32_1 = arith.constant 0 : i32
    return %c0_i32, %c0_i32_0 : i32, i32
  }
  func.func @transform_3(%arg0: i32) -> (i32, i32) {
    %c0_i32 = arith.constant 0 : i32
    %c0_i32_0 = arith.constant 0 : i32
    return %arg0, %c0_i32 : i32, i32
  }
}

module attributes {stable_mosaic.version = 11 : i64} {
  func.func @_gemm_kernel(%arg0: i32, %arg1: memref<8x256xf32, #tpu.memory_space<vmem>>, %arg2: memref<256x32xf32, #tpu.memory_space<vmem>>, %arg3: memref<1x32xf32, #tpu.memory_space<vmem>>, %arg4: memref<8x32xf32, #tpu.memory_space<vmem>>) attributes {dimension_semantics = [#tpu.dimension_semantics<parallel>], iteration_bounds = array<i64: 1>, scalar_prefetch = 0 : i64, scratch_operands = 0 : i64, tpu.core_type = #tpu.core_type<tc>, window_params = [{transform_indices = @transform_0, window_bounds = array<i64: 8, 256>}, {pipeline_mode = #tpu.pipeline_mode<synchronous>, transform_indices = @transform_1, window_bounds = array<i64: 256, 32>}, {pipeline_mode = #tpu.pipeline_mode<synchronous>, transform_indices = @transform_2, window_bounds = array<i64: 1, 32>}, {transform_indices = @transform_3, window_bounds = array<i64: 8, 32>}]} {
    %c0 = arith.constant 0 : index
    %c0_0 = arith.constant 0 : index
    %0 = vector.load %arg1[%c0, %c0_0] : memref<8x256xf32, #tpu.memory_space<vmem>>, vector<8x256xf32>
    %c0_1 = arith.constant 0 : index
    %c0_2 = arith.constant 0 : index
    %1 = vector.load %arg2[%c0_1, %c0_2] : memref<256x32xf32, #tpu.memory_space<vmem>>, vector<256x32xf32>
    %cst = arith.constant dense<0.000000e+00> : vector<8x32xf32>
    %2 = tpu.matmul %0, %1, %cst {dimension_numbers = #tpu.dot_dimension_numbers<[1], [0], [0], [1], [0, 0, 1, 1], [], []>} : vector<8x256xf32>, vector<256x32xf32>, vector<8x32xf32> -> vector<8x32xf32>
    %c0_3 = arith.constant 0 : index
    %c0_4 = arith.constant 0 : index
    %3 = vector.load %arg3[%c0_3, %c0_4] : memref<1x32xf32, #tpu.memory_space<vmem>>, vector<1x32xf32>
    %4 = vector.broadcast %3 : vector<1x32xf32> to vector<8x32xf32>
    %5 = arith.addf %2, %4 : vector<8x32xf32>
    %c0_5 = arith.constant 0 : index
    %c0_6 = arith.constant 0 : index
    %6 = vector.load %arg4[%c0_5, %c0_6] : memref<8x32xf32, #tpu.memory_space<vmem>>, vector<8x32xf32>
    tpu.vector_store %arg4[%c0_5, %c0_6], %5 {strides = array<i32>} : memref<8x32xf32, #tpu.memory_space<vmem>>, vector<8x32xf32>,
    return
  }
  func.func @transform_0(%arg0: i32) -> (i32, i32) {
    %c0_i32 = arith.constant 0 : i32
    %c0_i32_0 = arith.constant 0 : i32
    return %arg0, %c0_i32 : i32, i32
  }
  func.func @transform_1(%arg0: i32) -> (i32, i32) {
    %c0_i32 = arith.constant 0 : i32
    %c0_i32_0 = arith.constant 0 : i32
    %c0_i32_1 = arith.constant 0 : i32
    return %c0_i32, %c0_i32_0 : i32, i32
  }
  func.func @transform_2(%arg0: i32) -> (i32, i32) {
    %c0_i32 = arith.constant 0 : i32
    %c0_i32_0 = arith.constant 0 : i32
    %c0_i32_1 = arith.constant 0 : i32
    return %c0_i32, %c0_i32_0 : i32, i32
  }
  func.func @transform_3(%arg0: i32) -> (i32, i32) {
    %c0_i32 = arith.constant 0 : i32
    %c0_i32_0 = arith.constant 0 : i32
    return %arg0, %c0_i32 : i32, i32
  }
}

module attributes {stable_mosaic.version = 11 : i64} {
  func.func @_gemm_kernel(%arg0: i32, %arg1: memref<8x288xf32, #tpu.memory_space<vmem>>, %arg2: memref<288x64xf32, #tpu.memory_space<vmem>>, %arg3: memref<1x64xf32, #tpu.memory_space<vmem>>, %arg4: memref<8x64xf32, #tpu.memory_space<vmem>>) attributes {dimension_semantics = [#tpu.dimension_semantics<parallel>], iteration_bounds = array<i64: 1>, scalar_prefetch = 0 : i64, scratch_operands = 0 : i64, tpu.core_type = #tpu.core_type<tc>, window_params = [{transform_indices = @transform_0, window_bounds = array<i64: 8, 288>}, {pipeline_mode = #tpu.pipeline_mode<synchronous>, transform_indices = @transform_1, window_bounds = array<i64: 288, 64>}, {pipeline_mode = #tpu.pipeline_mode<synchronous>, transform_indices = @transform_2, window_bounds = array<i64: 1, 64>}, {transform_indices = @transform_3, window_bounds = array<i64: 8, 64>}]} {
    %c0 = arith.constant 0 : index
    %c0_0 = arith.constant 0 : index
    %0 = vector.load %arg1[%c0, %c0_0] : memref<8x288xf32, #tpu.memory_space<vmem>>, vector<8x288xf32>
    %c0_1 = arith.constant 0 : index
    %c0_2 = arith.constant 0 : index
    %1 = vector.load %arg2[%c0_1, %c0_2] : memref<288x64xf32, #tpu.memory_space<vmem>>, vector<288x64xf32>
    %cst = arith.constant dense<0.000000e+00> : vector<8x64xf32>
    %2 = tpu.matmul %0, %1, %cst {dimension_numbers = #tpu.dot_dimension_numbers<[1], [0], [0], [1], [0, 0, 1, 1], [], []>} : vector<8x288xf32>, vector<288x64xf32>, vector<8x64xf32> -> vector<8x64xf32>
    %c0_3 = arith.constant 0 : index
    %c0_4 = arith.constant 0 : index
    %3 = vector.load %arg3[%c0_3, %c0_4] : memref<1x64xf32, #tpu.memory_space<vmem>>, vector<1x64xf32>
    %4 = vector.broadcast %3 : vector<1x64xf32> to vector<8x64xf32>
    %5 = arith.addf %2, %4 : vector<8x64xf32>
    %c0_5 = arith.constant 0 : index
    %c0_6 = arith.constant 0 : index
    %6 = vector.load %arg4[%c0_5, %c0_6] : memref<8x64xf32, #tpu.memory_space<vmem>>, vector<8x64xf32>
    tpu.vector_store %arg4[%c0_5, %c0_6], %5 {strides = array<i32>} : memref<8x64xf32, #tpu.memory_space<vmem>>, vector<8x64xf32>,
    return
  }
  func.func @transform_0(%arg0: i32) -> (i32, i32) {
    %c0_i32 = arith.constant 0 : i32
    %c0_i32_0 = arith.constant 0 : i32
    return %arg0, %c0_i32 : i32, i32
  }
  func.func @transform_1(%arg0: i32) -> (i32, i32) {
    %c0_i32 = arith.constant 0 : i32
    %c0_i32_0 = arith.constant 0 : i32
    %c0_i32_1 = arith.constant 0 : i32
    return %c0_i32, %c0_i32_0 : i32, i32
  }
  func.func @transform_2(%arg0: i32) -> (i32, i32) {
    %c0_i32 = arith.constant 0 : i32
    %c0_i32_0 = arith.constant 0 : i32
    %c0_i32_1 = arith.constant 0 : i32
    return %c0_i32, %c0_i32_0 : i32, i32
  }
  func.func @transform_3(%arg0: i32) -> (i32, i32) {
    %c0_i32 = arith.constant 0 : i32
    %c0_i32_0 = arith.constant 0 : i32
    return %arg0, %c0_i32 : i32, i32
  }
}

module attributes {stable_mosaic.version = 11 : i64} {
  func.func @_gemm_kernel(%arg0: i32, %arg1: memref<32x144xf32, #tpu.memory_space<vmem>>, %arg2: memref<32x144xf32, #tpu.memory_space<vmem>>, %arg3: memref<144x32xf32, #tpu.memory_space<vmem>>, %arg4: memref<144x32xf32, #tpu.memory_space<vmem>>, %arg5: memref<1x32xf32, #tpu.memory_space<vmem>>, %arg6: memref<32x32xf32, #tpu.memory_space<vmem>>) attributes {dimension_semantics = [#tpu.dimension_semantics<parallel>], iteration_bounds = array<i64: 1>, scalar_prefetch = 0 : i64, scratch_operands = 0 : i64, tpu.core_type = #tpu.core_type<tc>, window_params = [{transform_indices = @transform_0, window_bounds = array<i64: 32, 144>}, {transform_indices = @transform_1, window_bounds = array<i64: 32, 144>}, {pipeline_mode = #tpu.pipeline_mode<synchronous>, transform_indices = @transform_2, window_bounds = array<i64: 144, 32>}, {pipeline_mode = #tpu.pipeline_mode<synchronous>, transform_indices = @transform_3, window_bounds = array<i64: 144, 32>}, {pipeline_mode = #tpu.pipeline_mode<synchronous>, transform_indices = @transform_4, window_bounds = array<i64: 1, 32>}, {transform_indices = @transform_5, window_bounds = array<i64: 32, 32>}]} {
    %c0 = arith.constant 0 : index
    %c0_0 = arith.constant 0 : index
    %0 = vector.load %arg1[%c0, %c0_0] : memref<32x144xf32, #tpu.memory_space<vmem>>, vector<32x144xf32>
    %c0_1 = arith.constant 0 : index
    %c0_2 = arith.constant 0 : index
    %1 = vector.load %arg3[%c0_1, %c0_2] : memref<144x32xf32, #tpu.memory_space<vmem>>, vector<144x32xf32>
    %cst = arith.constant dense<0.000000e+00> : vector<32x32xf32>
    %2 = tpu.matmul %0, %1, %cst {dimension_numbers = #tpu.dot_dimension_numbers<[1], [0], [0], [1], [0, 0, 1, 1], [], []>} : vector<32x144xf32>, vector<144x32xf32>, vector<32x32xf32> -> vector<32x32xf32>
    %c0_3 = arith.constant 0 : index
    %c0_4 = arith.constant 0 : index
    %3 = vector.load %arg2[%c0_3, %c0_4] : memref<32x144xf32, #tpu.memory_space<vmem>>, vector<32x144xf32>
    %c0_5 = arith.constant 0 : index
    %c0_6 = arith.constant 0 : index
    %4 = vector.load %arg4[%c0_5, %c0_6] : memref<144x32xf32, #tpu.memory_space<vmem>>, vector<144x32xf32>
    %cst_7 = arith.constant dense<0.000000e+00> : vector<32x32xf32>
    %5 = tpu.matmul %3, %4, %cst_7 {dimension_numbers = #tpu.dot_dimension_numbers<[1], [0], [0], [1], [0, 0, 1, 1], [], []>} : vector<32x144xf32>, vector<144x32xf32>, vector<32x32xf32> -> vector<32x32xf32>
    %6 = arith.addf %2, %5 : vector<32x32xf32>
    %c0_8 = arith.constant 0 : index
    %c0_9 = arith.constant 0 : index
    %7 = vector.load %arg5[%c0_8, %c0_9] : memref<1x32xf32, #tpu.memory_space<vmem>>, vector<1x32xf32>
    %8 = vector.broadcast %7 : vector<1x32xf32> to vector<32x32xf32>
    %9 = arith.addf %6, %8 : vector<32x32xf32>
    %c0_10 = arith.constant 0 : index
    %c0_11 = arith.constant 0 : index
    %10 = vector.load %arg6[%c0_10, %c0_11] : memref<32x32xf32, #tpu.memory_space<vmem>>, vector<32x32xf32>
    tpu.vector_store %arg6[%c0_10, %c0_11], %9 {strides = array<i32>} : memref<32x32xf32, #tpu.memory_space<vmem>>, vector<32x32xf32>,
    return
  }
  func.func @transform_0(%arg0: i32) -> (i32, i32) {
    %c0_i32 = arith.constant 0 : i32
    %c0_i32_0 = arith.constant 0 : i32
    return %arg0, %c0_i32 : i32, i32
  }
  func.func @transform_1(%arg0: i32) -> (i32, i32) {
    %c0_i32 = arith.constant 0 : i32
    %c0_i32_0 = arith.constant 0 : i32
    return %arg0, %c0_i32 : i32, i32
  }
  func.func @transform_2(%arg0: i32) -> (i32, i32) {
    %c0_i32 = arith.constant 0 : i32
    %c0_i32_0 = arith.constant 0 : i32
    %c0_i32_1 = arith.constant 0 : i32
    return %c0_i32, %c0_i32_0 : i32, i32
  }
  func.func @transform_3(%arg0: i32) -> (i32, i32) {
    %c0_i32 = arith.constant 0 : i32
    %c0_i32_0 = arith.constant 0 : i32
    %c0_i32_1 = arith.constant 0 : i32
    return %c0_i32, %c0_i32_0 : i32, i32
  }
  func.func @transform_4(%arg0: i32) -> (i32, i32) {
    %c0_i32 = arith.constant 0 : i32
    %c0_i32_0 = arith.constant 0 : i32
    %c0_i32_1 = arith.constant 0 : i32
    return %c0_i32, %c0_i32_0 : i32, i32
  }
  func.func @transform_5(%arg0: i32) -> (i32, i32) {
    %c0_i32 = arith.constant 0 : i32
    %c0_i32_0 = arith.constant 0 : i32
    return %arg0, %c0_i32 : i32, i32
  }
}

module attributes {stable_mosaic.version = 11 : i64} {
  func.func @_gemm_kernel(%arg0: i32, %arg1: memref<128x72xf32, #tpu.memory_space<vmem>>, %arg2: memref<128x72xf32, #tpu.memory_space<vmem>>, %arg3: memref<72x12xf32, #tpu.memory_space<vmem>>, %arg4: memref<72x12xf32, #tpu.memory_space<vmem>>, %arg5: memref<1x12xf32, #tpu.memory_space<vmem>>, %arg6: memref<128x12xf32, #tpu.memory_space<vmem>>) attributes {dimension_semantics = [#tpu.dimension_semantics<parallel>], iteration_bounds = array<i64: 1>, scalar_prefetch = 0 : i64, scratch_operands = 0 : i64, tpu.core_type = #tpu.core_type<tc>, window_params = [{transform_indices = @transform_0, window_bounds = array<i64: 128, 72>}, {transform_indices = @transform_1, window_bounds = array<i64: 128, 72>}, {pipeline_mode = #tpu.pipeline_mode<synchronous>, transform_indices = @transform_2, window_bounds = array<i64: 72, 12>}, {pipeline_mode = #tpu.pipeline_mode<synchronous>, transform_indices = @transform_3, window_bounds = array<i64: 72, 12>}, {pipeline_mode = #tpu.pipeline_mode<synchronous>, transform_indices = @transform_4, window_bounds = array<i64: 1, 12>}, {transform_indices = @transform_5, window_bounds = array<i64: 128, 12>}]} {
    %c0 = arith.constant 0 : index
    %c0_0 = arith.constant 0 : index
    %0 = vector.load %arg1[%c0, %c0_0] : memref<128x72xf32, #tpu.memory_space<vmem>>, vector<128x72xf32>
    %c0_1 = arith.constant 0 : index
    %c0_2 = arith.constant 0 : index
    %1 = vector.load %arg3[%c0_1, %c0_2] : memref<72x12xf32, #tpu.memory_space<vmem>>, vector<72x12xf32>
    %cst = arith.constant dense<0.000000e+00> : vector<128x12xf32>
    %2 = tpu.matmul %0, %1, %cst {dimension_numbers = #tpu.dot_dimension_numbers<[1], [0], [0], [1], [0, 0, 1, 1], [], []>} : vector<128x72xf32>, vector<72x12xf32>, vector<128x12xf32> -> vector<128x12xf32>
    %c0_3 = arith.constant 0 : index
    %c0_4 = arith.constant 0 : index
    %3 = vector.load %arg2[%c0_3, %c0_4] : memref<128x72xf32, #tpu.memory_space<vmem>>, vector<128x72xf32>
    %c0_5 = arith.constant 0 : index
    %c0_6 = arith.constant 0 : index
    %4 = vector.load %arg4[%c0_5, %c0_6] : memref<72x12xf32, #tpu.memory_space<vmem>>, vector<72x12xf32>
    %cst_7 = arith.constant dense<0.000000e+00> : vector<128x12xf32>
    %5 = tpu.matmul %3, %4, %cst_7 {dimension_numbers = #tpu.dot_dimension_numbers<[1], [0], [0], [1], [0, 0, 1, 1], [], []>} : vector<128x72xf32>, vector<72x12xf32>, vector<128x12xf32> -> vector<128x12xf32>
    %6 = arith.addf %2, %5 : vector<128x12xf32>
    %c0_8 = arith.constant 0 : index
    %c0_9 = arith.constant 0 : index
    %7 = vector.load %arg5[%c0_8, %c0_9] : memref<1x12xf32, #tpu.memory_space<vmem>>, vector<1x12xf32>
    %8 = vector.broadcast %7 : vector<1x12xf32> to vector<128x12xf32>
    %9 = arith.addf %6, %8 : vector<128x12xf32>
    %10 = math.tanh %9 : vector<128x12xf32>
    %c0_10 = arith.constant 0 : index
    %c0_11 = arith.constant 0 : index
    %11 = vector.load %arg6[%c0_10, %c0_11] : memref<128x12xf32, #tpu.memory_space<vmem>>, vector<128x12xf32>
    tpu.vector_store %arg6[%c0_10, %c0_11], %10 {strides = array<i32>} : memref<128x12xf32, #tpu.memory_space<vmem>>, vector<128x12xf32>,
    return
  }
  func.func @transform_0(%arg0: i32) -> (i32, i32) {
    %c0_i32 = arith.constant 0 : i32
    %c0_i32_0 = arith.constant 0 : i32
    return %arg0, %c0_i32 : i32, i32
  }
  func.func @transform_1(%arg0: i32) -> (i32, i32) {
    %c0_i32 = arith.constant 0 : i32
    %c0_i32_0 = arith.constant 0 : i32
    return %arg0, %c0_i32 : i32, i32
  }
  func.func @transform_2(%arg0: i32) -> (i32, i32) {
    %c0_i32 = arith.constant 0 : i32
    %c0_i32_0 = arith.constant 0 : i32
    %c0_i32_1 = arith.constant 0 : i32
    return %c0_i32, %c0_i32_0 : i32, i32
  }
  func.func @transform_3(%arg0: i32) -> (i32, i32) {
    %c0_i32 = arith.constant 0 : i32
    %c0_i32_0 = arith.constant 0 : i32
    %c0_i32_1 = arith.constant 0 : i32
    return %c0_i32, %c0_i32_0 : i32, i32
  }
  func.func @transform_4(%arg0: i32) -> (i32, i32) {
    %c0_i32 = arith.constant 0 : i32
    %c0_i32_0 = arith.constant 0 : i32
    %c0_i32_1 = arith.constant 0 : i32
    return %c0_i32, %c0_i32_0 : i32, i32
  }
  func.func @transform_5(%arg0: i32) -> (i32, i32) {
    %c0_i32 = arith.constant 0 : i32
    %c0_i32_0 = arith.constant 0 : i32
    return %arg0, %c0_i32 : i32, i32
  }
}

</mosaic_0001>

<llo_original>
// kernel: _lambda_.6
$region0: #{_lambda_.6}
  #allocation0 [shape = 'u32[]', space=smem, size = 0x4, offset = 0x4, fixed_abs, tag = 'smem constant byte address 0x4 - core index']
  #allocation1 [shape = 'u32[144,128]{1,0:T(1,128)}', space=vmem, size = 0x12000, scoped, tag = 'internal scratch']
  %s0 = inlined_call_operand.vmem [shape: f32[128,96], index: 0, kind: input, shape index: {}]
  %s1 = inlined_call_operand.vmem [shape: f32[96,8], index: 1, kind: input, shape index: {}]
  %s2 = inlined_call_operand.vmem [shape: f32[1,8], index: 2, kind: input, shape index: {}]
  %s3 = inlined_call_operand.vmem [shape: f32[128,8], index: 3, kind: output, shape index: {}]
  %s4 = sld [smem:[#allocation0]]
  $region22: #{_lambda_.6} parent=0
    _
  %s6 = ssub.s32 1, %s4
  %s7 = scalar_select 0, %s6, %s4
  // Predicated region
  $region2: #{_lambda_.6} parent=0 // pred_check
    _
  $region3: #{_lambda_.6} parent=0 // pred_check_branch
    %9 = sbr.rel (0) target = $region5
  $region4: #{_lambda_.6} parent=0 // pred_region
    _
  $region5: #{_lambda_.6} parent=0 // pred_fallthru
    _
  // Predicated region
  $region6: #{_lambda_.6} parent=0 // pred_check
    _
  $region7: #{_lambda_.6} parent=0 // pred_check_branch
    %11 = sbr.rel (0) target = $region9
  $region8: #{_lambda_.6} parent=0 // pred_region
    _
  $region9: #{_lambda_.6} parent=0 // pred_fallthru
    _
  // Predicated region
  $region10: #{_lambda_.6} parent=0 // pred_check
    _
  $region11: #{_lambda_.6} parent=0 // pred_check_branch
    %13 = sbr.rel (0) target = $region13
  $region12: #{_lambda_.6} parent=0 // pred_region
    _
  $region13: #{_lambda_.6} parent=0 // pred_fallthru
    _
  %v14 = vld [vmem:[%s0] sm:$0xff]
  %v15 = vld [vmem:[%s0 + $0x8] sm:$0xff]
  %v16 = vld [vmem:[%s0 + $0x10] sm:$0xff]
  %v17 = vld [vmem:[%s0 + $0x18] sm:$0xff]
  %v18 = vld [vmem:[%s0 + $0x20] sm:$0xff]
  %v19 = vld [vmem:[%s0 + $0x28] sm:$0xff]
  %v20 = vld [vmem:[%s0 + $0x30] sm:$0xff]
  %v21 = vld [vmem:[%s0 + $0x38] sm:$0xff]
  %v22 = vld [vmem:[%s0 + $0x40] sm:$0xff]
  %v23 = vld [vmem:[%s0 + $0x48] sm:$0xff]
  %v24 = vld [vmem:[%s0 + $0x50] sm:$0xff]
  %v25 = vld [vmem:[%s0 + $0x58] sm:$0xff]
  %v26 = vld [vmem:[%s0 + $0x60] sm:$0xff]
  %v27 = vld [vmem:[%s0 + $0x68] sm:$0xff]
  %v28 = vld [vmem:[%s0 + $0x70] sm:$0xff]
  %v29 = vld [vmem:[%s0 + $0x78] sm:$0xff]
  %v30 = vld [vmem:[%s1] sm:$0xff]
  %v31 = vld [vmem:[%s1 + $0x8] sm:$0xff]
  %v32 = vld [vmem:[%s1 + $0x10] sm:$0xff]
  %v33 = vld [vmem:[%s1 + $0x18] sm:$0xff]
  %v34 = vld [vmem:[%s1 + $0x20] sm:$0xff]
  %v35 = vld [vmem:[%s1 + $0x28] sm:$0xff]
  %v36 = vld [vmem:[%s1 + $0x30] sm:$0xff]
  %v37 = vld [vmem:[%s1 + $0x38] sm:$0xff]
  %v38 = vld [vmem:[%s1 + $0x40] sm:$0xff]
  %v39 = vld [vmem:[%s1 + $0x48] sm:$0xff]
  %v40 = vld [vmem:[%s1 + $0x50] sm:$0xff]
  %v41 = vld [vmem:[%s1 + $0x58] sm:$0xff]
  %v42 = vld [vmem:[%s2] sm:$0x1]
  %v44 = vlaneseq
  %v45 = vshrl.u32 %v44, 7
  %v46 = vsub.s32 0, %v45
  %v47 = vrot.slane %v42, %v46
  %vm49 = vcmask 785408
  %v51 = vsel %vm49, %v14, 0
  %v54 = vsel %vm49, %v15, 0
  %v57 = vsel %vm49, %v16, 0
  %v60 = vsel %vm49, %v17, 0
  %v63 = vsel %vm49, %v18, 0
  %v66 = vsel %vm49, %v19, 0
  %v69 = vsel %vm49, %v20, 0
  %v72 = vsel %vm49, %v21, 0
  %v75 = vsel %vm49, %v22, 0
  %v78 = vsel %vm49, %v23, 0
  %v81 = vsel %vm49, %v24, 0
  %v84 = vsel %vm49, %v25, 0
  %v87 = vsel %vm49, %v26, 0
  %v90 = vsel %vm49, %v27, 0
  %v93 = vsel %vm49, %v28, 0
  %v96 = vsel %vm49, %v29, 0
  %98 = vmatprep.subr.mxu0 0.0
  %99 = vmatpush1.msra.mxu0 0.0
  %100 = vmatprep.subr.mxu0 0.0
  %101 = vmatpush1.msra.mxu0 0.0
  %102 = vmatprep.subr.mxu0 0.0
  %103 = vmatpush1.msra.mxu0 0.0
  %104 = vmatprep.subr.mxu0 0.0
  %105 = vmatpush1.msra.mxu0 0.0
  %106 = vmatprep.subr.mxu0 0.0
  %107 = vmatpush1.msra.mxu0 %v41
  %108 = vmatprep.subr.mxu0 0.0
  %109 = vmatpush1.msra.mxu0 %v40
  %110 = vmatprep.subr.mxu0 0.0
  %111 = vmatpush1.msra.mxu0 %v39
  %112 = vmatprep.subr.mxu0 0.0
  %113 = vmatpush1.msra.mxu0 %v38
  %114 = vmatprep.subr.mxu0 0.0
  %115 = vmatpush1.msra.mxu0 %v37
  %116 = vmatprep.subr.mxu0 0.0
  %117 = vmatpush1.msra.mxu0 %v36
  %118 = vmatprep.subr.mxu0 0.0
  %119 = vmatpush1.msra.mxu0 %v35
  %120 = vmatprep.subr.mxu0 0.0
  %121 = vmatpush1.msra.mxu0 %v34
  %122 = vmatprep.subr.mxu0 0.0
  %123 = vmatpush1.msra.mxu0 %v33
  %124 = vmatprep.subr.mxu0 0.0
  %125 = vmatpush1.msra.mxu0 %v32
  %126 = vmatprep.subr.mxu0 0.0
  %127 = vmatpush1.msra.mxu0 %v31
  %128 = vmatprep.subr.mxu0 0.0
  %129 = vmatpush1.msra.mxu0 %v30
  %130 = vmatprep.subr.mxu0 0.0
  %131 = vmatpush2.msra.mxu0 0.0
  %132 = vmatprep.subr.mxu0 0.0
  %133 = vmatpush2.msra.mxu0 0.0
  %134 = vmatprep.subr.mxu0 0.0
  %135 = vmatpush2.msra.mxu0 0.0
  %136 = vmatprep.subr.mxu0 0.0
  %137 = vmatpush2.msra.mxu0 0.0
  %138 = vmatprep.subr.mxu0 0.0
  %139 = vmatpush2.msra.mxu0 0.0
  %140 = vmatprep.subr.mxu0 0.0
  %141 = vmatpush2.msra.mxu0 0.0
  %142 = vmatprep.subr.mxu0 0.0
  %143 = vmatpush2.msra.mxu0 0.0
  %144 = vmatprep.subr.mxu0 0.0
  %145 = vmatpush2.msra.mxu0 0.0
  %146 = vmatprep.subr.mxu0 0.0
  %147 = vmatpush2.msra.mxu0 0.0
  %148 = vmatprep.subr.mxu0 0.0
  %149 = vmatpush2.msra.mxu0 0.0
  %150 = vmatprep.subr.mxu0 0.0
  %151 = vmatpush2.msra.mxu0 0.0
  %152 = vmatprep.subr.mxu0 0.0
  %153 = vmatpush2.msra.mxu0 0.0
  %154 = vmatprep.subr.mxu0 0.0
  %155 = vmatpush2.msra.mxu0 0.0
  %156 = vmatprep.subr.mxu0 0.0
  %157 = vmatpush2.msra.mxu0 0.0
  %158 = vmatprep.subr.mxu0 0.0
  %159 = vmatpush2.msra.mxu0 0.0
  %160 = vmatprep.subr.mxu0 0.0
  %161 = vmatpush2.msra.mxu0 0.0
  %162 = vmatprep.mubr.f32.mxu0 0.0
  %163 = vmatmul.mubr.f32.gmra.mxu0 %v51
  %v164 = vpop.f32.mrf.mxu0
  %v165 = vadd.f32 %v47, %v164
  %v166 = vpop.f32.mrf.mxu0
  %167 = vmatprep.mubr.f32.mxu0 0.0
  %168 = vmatmul.mubr.f32.gmra.mxu0 %v54
  %v169 = vpop.f32.mrf.mxu0
  %v170 = vadd.f32 %v47, %v169
  %v171 = vpop.f32.mrf.mxu0
  %172 = vmatprep.mubr.f32.mxu0 0.0
  %173 = vmatmul.mubr.f32.gmra.mxu0 %v57
  %v174 = vpop.f32.mrf.mxu0
  %v175 = vadd.f32 %v47, %v174
  %v176 = vpop.f32.mrf.mxu0
  %177 = vmatprep.mubr.f32.mxu0 0.0
  %178 = vmatmul.mubr.f32.gmra.mxu0 %v60
  %v179 = vpop.f32.mrf.mxu0
  %v180 = vadd.f32 %v47, %v179
  %v181 = vpop.f32.mrf.mxu0
  %182 = vmatprep.mubr.f32.mxu0 0.0
  %183 = vmatmul.mubr.f32.gmra.mxu0 %v63
  %v184 = vpop.f32.mrf.mxu0
  %v185 = vadd.f32 %v47, %v184
  %v186 = vpop.f32.mrf.mxu0
  %187 = vmatprep.mubr.f32.mxu0 0.0
  %188 = vmatmul.mubr.f32.gmra.mxu0 %v66
  %v189 = vpop.f32.mrf.mxu0
  %v190 = vadd.f32 %v47, %v189
  %v191 = vpop.f32.mrf.mxu0
  %192 = vmatprep.mubr.f32.mxu0 0.0
  %193 = vmatmul.mubr.f32.gmra.mxu0 %v69
  %v194 = vpop.f32.mrf.mxu0
  %v195 = vadd.f32 %v47, %v194
  %v196 = vpop.f32.mrf.mxu0
  %197 = vmatprep.mubr.f32.mxu0 0.0
  %198 = vmatmul.mubr.f32.gmra.mxu0 %v72
  %v199 = vpop.f32.mrf.mxu0
  %v200 = vadd.f32 %v47, %v199
  %v201 = vpop.f32.mrf.mxu0
  %202 = vmatprep.mubr.f32.mxu0 0.0
  %203 = vmatmul.mubr.f32.gmra.mxu0 %v75
  %v204 = vpop.f32.mrf.mxu0
  %v205 = vadd.f32 %v47, %v204
  %v206 = vpop.f32.mrf.mxu0
  %207 = vmatprep.mubr.f32.mxu0 0.0
  %208 = vmatmul.mubr.f32.gmra.mxu0 %v78
  %v209 = vpop.f32.mrf.mxu0
  %v210 = vadd.f32 %v47, %v209
  %v211 = vpop.f32.mrf.mxu0
  %212 = vmatprep.mubr.f32.mxu0 0.0
  %213 = vmatmul.mubr.f32.gmra.mxu0 %v81
  %v214 = vpop.f32.mrf.mxu0
  %v215 = vadd.f32 %v47, %v214
  %v216 = vpop.f32.mrf.mxu0
  %217 = vmatprep.mubr.f32.mxu0 0.0
  %218 = vmatmul.mubr.f32.gmra.mxu0 %v84
  %v219 = vpop.f32.mrf.mxu0
  %v220 = vadd.f32 %v47, %v219
  %v221 = vpop.f32.mrf.mxu0
  %222 = vmatprep.mubr.f32.mxu0 0.0
  %223 = vmatmul.mubr.f32.gmra.mxu0 %v87
  %v224 = vpop.f32.mrf.mxu0
  %v225 = vadd.f32 %v47, %v224
  %v226 = vpop.f32.mrf.mxu0
  %227 = vmatprep.mubr.f32.mxu0 0.0
  %228 = vmatmul.mubr.f32.gmra.mxu0 %v90
  %v229 = vpop.f32.mrf.mxu0
  %v230 = vadd.f32 %v47, %v229
  %v231 = vpop.f32.mrf.mxu0
  %232 = vmatprep.mubr.f32.mxu0 0.0
  %233 = vmatmul.mubr.f32.gmra.mxu0 %v93
  %v234 = vpop.f32.mrf.mxu0
  %v235 = vadd.f32 %v47, %v234
  %v236 = vpop.f32.mrf.mxu0
  %237 = vmatprep.mubr.f32.mxu0 0.0
  %238 = vmatmul.mubr.f32.gmra.mxu0 %v96
  %v239 = vpop.f32.mrf.mxu0
  %v240 = vadd.f32 %v47, %v239
  %v241 = vpop.f32.mrf.mxu0
  %242 = vdwg.mxu0
  %vm243 = vcmask 64512
  %244 = vst.msk [vmem:[%s3] sm:$0xff] %vm243, %v165
  %245 = vst.msk [vmem:[%s3 + $0x8] sm:$0xff] %vm243, %v170
  %246 = vst.msk [vmem:[%s3 + $0x10] sm:$0xff] %vm243, %v175
  %247 = vst.msk [vmem:[%s3 + $0x18] sm:$0xff] %vm243, %v180
  %248 = vst.msk [vmem:[%s3 + $0x20] sm:$0xff] %vm243, %v185
  %249 = vst.msk [vmem:[%s3 + $0x28] sm:$0xff] %vm243, %v190
  %250 = vst.msk [vmem:[%s3 + $0x30] sm:$0xff] %vm243, %v195
  %251 = vst.msk [vmem:[%s3 + $0x38] sm:$0xff] %vm243, %v200
  %252 = vst.msk [vmem:[%s3 + $0x40] sm:$0xff] %vm243, %v205
  %253 = vst.msk [vmem:[%s3 + $0x48] sm:$0xff] %vm243, %v210
  %254 = vst.msk [vmem:[%s3 + $0x50] sm:$0xff] %vm243, %v215
  %255 = vst.msk [vmem:[%s3 + $0x58] sm:$0xff] %vm243, %v220
  %256 = vst.msk [vmem:[%s3 + $0x60] sm:$0xff] %vm243, %v225
  %257 = vst.msk [vmem:[%s3 + $0x68] sm:$0xff] %vm243, %v230
  %258 = vst.msk [vmem:[%s3 + $0x70] sm:$0xff] %vm243, %v235
  %259 = vst.msk [vmem:[%s3 + $0x78] sm:$0xff] %vm243, %v240
  // Predicated region
  $region14: #{_lambda_.6} parent=0 // pred_check
    _
  $region15: #{_lambda_.6} parent=0 // pred_check_branch
    %261 = sbr.rel (0) target = $region17
  $region16: #{_lambda_.6} parent=0 // pred_region
    _
  $region17: #{_lambda_.6} parent=0 // pred_fallthru
    _
  // Predicated region
  $region18: #{_lambda_.6} parent=0 // pred_check
    _
  $region19: #{_lambda_.6} parent=0 // pred_check_branch
    %263 = sbr.rel (0) target = $region21
  $region20: #{_lambda_.6} parent=0 // pred_region
    _
  $region21: #{_lambda_.6} parent=0 // pred_fallthru
    _

// kernel: _lambda_.7
$region0: #{_lambda_.7}
  #allocation0 [shape = 'u32[]', space=smem, size = 0x4, offset = 0x4, fixed_abs, tag = 'smem constant byte address 0x4 - core index']
  #allocation1 [shape = 'u32[144,128]{1,0:T(1,128)}', space=vmem, size = 0x12000, scoped, tag = 'internal scratch']
  %s0 = inlined_call_operand.vmem [shape: f32[32,128], index: 0, kind: input, shape index: {}]
  %s1 = inlined_call_operand.vmem [shape: f32[128,16], index: 1, kind: input, shape index: {}]
  %s2 = inlined_call_operand.vmem [shape: f32[1,16], index: 2, kind: input, shape index: {}]
  %s3 = inlined_call_operand.vmem [shape: f32[32,16], index: 3, kind: output, shape index: {}]
  %s4 = sld [smem:[#allocation0]]
  $region22: #{_lambda_.7} parent=0
    _
  %s6 = ssub.s32 1, %s4
  %s7 = scalar_select 0, %s6, %s4
  // Predicated region
  $region2: #{_lambda_.7} parent=0 // pred_check
    _
  $region3: #{_lambda_.7} parent=0 // pred_check_branch
    %9 = sbr.rel (0) target = $region5
  $region4: #{_lambda_.7} parent=0 // pred_region
    _
  $region5: #{_lambda_.7} parent=0 // pred_fallthru
    _
  // Predicated region
  $region6: #{_lambda_.7} parent=0 // pred_check
    _
  $region7: #{_lambda_.7} parent=0 // pred_check_branch
    %11 = sbr.rel (0) target = $region9
  $region8: #{_lambda_.7} parent=0 // pred_region
    _
  $region9: #{_lambda_.7} parent=0 // pred_fallthru
    _
  // Predicated region
  $region10: #{_lambda_.7} parent=0 // pred_check
    _
  $region11: #{_lambda_.7} parent=0 // pred_check_branch
    %13 = sbr.rel (0) target = $region13
  $region12: #{_lambda_.7} parent=0 // pred_region
    _
  $region13: #{_lambda_.7} parent=0 // pred_fallthru
    _
  %v14 = vld [vmem:[%s0] sm:$0xff]
  %v15 = vld [vmem:[%s0 + $0x8] sm:$0xff]
  %v16 = vld [vmem:[%s0 + $0x10] sm:$0xff]
  %v17 = vld [vmem:[%s0 + $0x18] sm:$0xff]
  %v18 = vld [vmem:[%s1] sm:$0xff]
  %v19 = vld [vmem:[%s1 + $0x8] sm:$0xff]
  %v20 = vld [vmem:[%s1 + $0x10] sm:$0xff]
  %v21 = vld [vmem:[%s1 + $0x18] sm:$0xff]
  %v22 = vld [vmem:[%s1 + $0x20] sm:$0xff]
  %v23 = vld [vmem:[%s1 + $0x28] sm:$0xff]
  %v24 = vld [vmem:[%s1 + $0x30] sm:$0xff]
  %v25 = vld [vmem:[%s1 + $0x38] sm:$0xff]
  %v26 = vld [vmem:[%s1 + $0x40] sm:$0xff]
  %v27 = vld [vmem:[%s1 + $0x48] sm:$0xff]
  %v28 = vld [vmem:[%s1 + $0x50] sm:$0xff]
  %v29 = vld [vmem:[%s1 + $0x58] sm:$0xff]
  %v30 = vld [vmem:[%s1 + $0x60] sm:$0xff]
  %v31 = vld [vmem:[%s1 + $0x68] sm:$0xff]
  %v32 = vld [vmem:[%s1 + $0x70] sm:$0xff]
  %v33 = vld [vmem:[%s1 + $0x78] sm:$0xff]
  %v34 = vld [vmem:[%s2] sm:$0x1]
  %v36 = vlaneseq
  %v37 = vshrl.u32 %v36, 7
  %v38 = vsub.s32 0, %v37
  %v39 = vrot.slane %v34, %v38
  %41 = vmatprep.subr.mxu0 0.0
  %42 = vmatpush1.msra.mxu0 %v33
  %43 = vmatprep.subr.mxu0 0.0
  %44 = vmatpush1.msra.mxu0 %v32
  %45 = vmatprep.subr.mxu0 0.0
  %46 = vmatpush1.msra.mxu0 %v31
  %47 = vmatprep.subr.mxu0 0.0
  %48 = vmatpush1.msra.mxu0 %v30
  %49 = vmatprep.subr.mxu0 0.0
  %50 = vmatpush1.msra.mxu0 %v29
  %51 = vmatprep.subr.mxu0 0.0
  %52 = vmatpush1.msra.mxu0 %v28
  %53 = vmatprep.subr.mxu0 0.0
  %54 = vmatpush1.msra.mxu0 %v27
  %55 = vmatprep.subr.mxu0 0.0
  %56 = vmatpush1.msra.mxu0 %v26
  %57 = vmatprep.subr.mxu0 0.0
  %58 = vmatpush1.msra.mxu0 %v25
  %59 = vmatprep.subr.mxu0 0.0
  %60 = vmatpush1.msra.mxu0 %v24
  %61 = vmatprep.subr.mxu0 0.0
  %62 = vmatpush1.msra.mxu0 %v23
  %63 = vmatprep.subr.mxu0 0.0
  %64 = vmatpush1.msra.mxu0 %v22
  %65 = vmatprep.subr.mxu0 0.0
  %66 = vmatpush1.msra.mxu0 %v21
  %67 = vmatprep.subr.mxu0 0.0
  %68 = vmatpush1.msra.mxu0 %v20
  %69 = vmatprep.subr.mxu0 0.0
  %70 = vmatpush1.msra.mxu0 %v19
  %71 = vmatprep.subr.mxu0 0.0
  %72 = vmatpush1.msra.mxu0 %v18
  %73 = vmatprep.subr.mxu0 0.0
  %74 = vmatpush2.msra.mxu0 0.0
  %75 = vmatprep.subr.mxu0 0.0
  %76 = vmatpush2.msra.mxu0 0.0
  %77 = vmatprep.subr.mxu0 0.0
  %78 = vmatpush2.msra.mxu0 0.0
  %79 = vmatprep.subr.mxu0 0.0
  %80 = vmatpush2.msra.mxu0 0.0
  %81 = vmatprep.subr.mxu0 0.0
  %82 = vmatpush2.msra.mxu0 0.0
  %83 = vmatprep.subr.mxu0 0.0
  %84 = vmatpush2.msra.mxu0 0.0
  %85 = vmatprep.subr.mxu0 0.0
  %86 = vmatpush2.msra.mxu0 0.0
  %87 = vmatprep.subr.mxu0 0.0
  %88 = vmatpush2.msra.mxu0 0.0
  %89 = vmatprep.subr.mxu0 0.0
  %90 = vmatpush2.msra.mxu0 0.0
  %91 = vmatprep.subr.mxu0 0.0
  %92 = vmatpush2.msra.mxu0 0.0
  %93 = vmatprep.subr.mxu0 0.0
  %94 = vmatpush2.msra.mxu0 0.0
  %95 = vmatprep.subr.mxu0 0.0
  %96 = vmatpush2.msra.mxu0 0.0
  %97 = vmatprep.subr.mxu0 0.0
  %98 = vmatpush2.msra.mxu0 0.0
  %99 = vmatprep.subr.mxu0 0.0
  %100 = vmatpush2.msra.mxu0 0.0
  %101 = vmatprep.subr.mxu0 0.0
  %102 = vmatpush2.msra.mxu0 0.0
  %103 = vmatprep.subr.mxu0 0.0
  %104 = vmatpush2.msra.mxu0 0.0
  %105 = vmatprep.mubr.f32.mxu0 0.0
  %106 = vmatmul.mubr.f32.gmra.mxu0 %v14
  %v107 = vpop.f32.mrf.mxu0
  %v108 = vadd.f32 %v39, %v107
  %v109 = vpop.f32.mrf.mxu0
  %110 = vmatprep.mubr.f32.mxu0 0.0
  %111 = vmatmul.mubr.f32.gmra.mxu0 %v15
  %v112 = vpop.f32.mrf.mxu0
  %v113 = vadd.f32 %v39, %v112
  %v114 = vpop.f32.mrf.mxu0
  %115 = vmatprep.mubr.f32.mxu0 0.0
  %116 = vmatmul.mubr.f32.gmra.mxu0 %v16
  %v117 = vpop.f32.mrf.mxu0
  %v118 = vadd.f32 %v39, %v117
  %v119 = vpop.f32.mrf.mxu0
  %120 = vmatprep.mubr.f32.mxu0 0.0
  %121 = vmatmul.mubr.f32.gmra.mxu0 %v17
  %v122 = vpop.f32.mrf.mxu0
  %v123 = vadd.f32 %v39, %v122
  %v124 = vpop.f32.mrf.mxu0
  %125 = vdwg.mxu0
  %vm126 = vcmask 130048
  %127 = vst.msk [vmem:[%s3] sm:$0xff] %vm126, %v108
  %128 = vst.msk [vmem:[%s3 + $0x8] sm:$0xff] %vm126, %v113
  %129 = vst.msk [vmem:[%s3 + $0x10] sm:$0xff] %vm126, %v118
  %130 = vst.msk [vmem:[%s3 + $0x18] sm:$0xff] %vm126, %v123
  // Predicated region
  $region14: #{_lambda_.7} parent=0 // pred_check
    _
  $region15: #{_lambda_.7} parent=0 // pred_check_branch
    %132 = sbr.rel (0) target = $region17
  $region16: #{_lambda_.7} parent=0 // pred_region
    _
  $region17: #{_lambda_.7} parent=0 // pred_fallthru
    _
  // Predicated region
  $region18: #{_lambda_.7} parent=0 // pred_check
    _
  $region19: #{_lambda_.7} parent=0 // pred_check_branch
    %134 = sbr.rel (0) target = $region21
  $region20: #{_lambda_.7} parent=0 // pred_region
    _
  $region21: #{_lambda_.7} parent=0 // pred_fallthru
    _

// kernel: _lambda_.8
$region0: #{_lambda_.8}
  #allocation0 [shape = 'u32[]', space=smem, size = 0x4, offset = 0x4, fixed_abs, tag = 'smem constant byte address 0x4 - core index']
  #allocation1 [shape = 'u32[144,128]{1,0:T(1,128)}', space=vmem, size = 0x12000, scoped, tag = 'internal scratch']
  %s0 = inlined_call_operand.vmem [shape: f32[8,256], index: 0, kind: input, shape index: {}]
  %s1 = inlined_call_operand.vmem [shape: f32[256,32], index: 1, kind: input, shape index: {}]
  %s2 = inlined_call_operand.vmem [shape: f32[1,32], index: 2, kind: input, shape index: {}]
  %s3 = inlined_call_operand.vmem [shape: f32[8,32], index: 3, kind: output, shape index: {}]
  %s4 = sld [smem:[#allocation0]]
  $region22: #{_lambda_.8} parent=0
    _
  %s6 = ssub.s32 1, %s4
  %s7 = scalar_select 0, %s6, %s4
  // Predicated region
  $region2: #{_lambda_.8} parent=0 // pred_check
    _
  $region3: #{_lambda_.8} parent=0 // pred_check_branch
    %9 = sbr.rel (0) target = $region5
  $region4: #{_lambda_.8} parent=0 // pred_region
    _
  $region5: #{_lambda_.8} parent=0 // pred_fallthru
    _
  // Predicated region
  $region6: #{_lambda_.8} parent=0 // pred_check
    _
  $region7: #{_lambda_.8} parent=0 // pred_check_branch
    %11 = sbr.rel (0) target = $region9
  $region8: #{_lambda_.8} parent=0 // pred_region
    _
  $region9: #{_lambda_.8} parent=0 // pred_fallthru
    _
  // Predicated region
  $region10: #{_lambda_.8} parent=0 // pred_check
    _
  $region11: #{_lambda_.8} parent=0 // pred_check_branch
    %13 = sbr.rel (0) target = $region13
  $region12: #{_lambda_.8} parent=0 // pred_region
    _
  $region13: #{_lambda_.8} parent=0 // pred_fallthru
    _
  %v14 = vld [vmem:[%s0] sm:$0xff]
  %v15 = vld [vmem:[%s0 + $0x8] sm:$0xff]
  %v16 = vld [vmem:[%s1] sm:$0xff]
  %v17 = vld [vmem:[%s1 + $0x8] sm:$0xff]
  %v18 = vld [vmem:[%s1 + $0x10] sm:$0xff]
  %v19 = vld [vmem:[%s1 + $0x18] sm:$0xff]
  %v20 = vld [vmem:[%s1 + $0x20] sm:$0xff]
  %v21 = vld [vmem:[%s1 + $0x28] sm:$0xff]
  %v22 = vld [vmem:[%s1 + $0x30] sm:$0xff]
  %v23 = vld [vmem:[%s1 + $0x38] sm:$0xff]
  %v24 = vld [vmem:[%s1 + $0x40] sm:$0xff]
  %v25 = vld [vmem:[%s1 + $0x48] sm:$0xff]
  %v26 = vld [vmem:[%s1 + $0x50] sm:$0xff]
  %v27 = vld [vmem:[%s1 + $0x58] sm:$0xff]
  %v28 = vld [vmem:[%s1 + $0x60] sm:$0xff]
  %v29 = vld [vmem:[%s1 + $0x68] sm:$0xff]
  %v30 = vld [vmem:[%s1 + $0x70] sm:$0xff]
  %v31 = vld [vmem:[%s1 + $0x78] sm:$0xff]
  %v32 = vld [vmem:[%s1 + $0x80] sm:$0xff]
  %v33 = vld [vmem:[%s1 + $0x88] sm:$0xff]
  %v34 = vld [vmem:[%s1 + $0x90] sm:$0xff]
  %v35 = vld [vmem:[%s1 + $0x98] sm:$0xff]
  %v36 = vld [vmem:[%s1 + $0xa0] sm:$0xff]
  %v37 = vld [vmem:[%s1 + $0xa8] sm:$0xff]
  %v38 = vld [vmem:[%s1 + $0xb0] sm:$0xff]
  %v39 = vld [vmem:[%s1 + $0xb8] sm:$0xff]
  %v40 = vld [vmem:[%s1 + $0xc0] sm:$0xff]
  %v41 = vld [vmem:[%s1 + $0xc8] sm:$0xff]
  %v42 = vld [vmem:[%s1 + $0xd0] sm:$0xff]
  %v43 = vld [vmem:[%s1 + $0xd8] sm:$0xff]
  %v44 = vld [vmem:[%s1 + $0xe0] sm:$0xff]
  %v45 = vld [vmem:[%s1 + $0xe8] sm:$0xff]
  %v46 = vld [vmem:[%s1 + $0xf0] sm:$0xff]
  %v47 = vld [vmem:[%s1 + $0xf8] sm:$0xff]
  %v48 = vld [vmem:[%s2] sm:$0x1]
  %v50 = vlaneseq
  %v51 = vshrl.u32 %v50, 7
  %v52 = vsub.s32 0, %v51
  %v53 = vrot.slane %v48, %v52
  %55 = vmatprep.subr.mxu0 0.0
  %56 = vmatpush1.msra.mxu0 %v31
  %57 = vmatprep.subr.mxu0 0.0
  %58 = vmatpush1.msra.mxu0 %v30
  %59 = vmatprep.subr.mxu0 0.0
  %60 = vmatpush1.msra.mxu0 %v29
  %61 = vmatprep.subr.mxu0 0.0
  %62 = vmatpush1.msra.mxu0 %v28
  %63 = vmatprep.subr.mxu0 0.0
  %64 = vmatpush1.msra.mxu0 %v27
  %65 = vmatprep.subr.mxu0 0.0
  %66 = vmatpush1.msra.mxu0 %v26
  %67 = vmatprep.subr.mxu0 0.0
  %68 = vmatpush1.msra.mxu0 %v25
  %69 = vmatprep.subr.mxu0 0.0
  %70 = vmatpush1.msra.mxu0 %v24
  %71 = vmatprep.subr.mxu0 0.0
  %72 = vmatpush1.msra.mxu0 %v23
  %73 = vmatprep.subr.mxu0 0.0
  %74 = vmatpush1.msra.mxu0 %v22
  %75 = vmatprep.subr.mxu0 0.0
  %76 = vmatpush1.msra.mxu0 %v21
  %77 = vmatprep.subr.mxu0 0.0
  %78 = vmatpush1.msra.mxu0 %v20
  %79 = vmatprep.subr.mxu0 0.0
  %80 = vmatpush1.msra.mxu0 %v19
  %81 = vmatprep.subr.mxu0 0.0
  %82 = vmatpush1.msra.mxu0 %v18
  %83 = vmatprep.subr.mxu0 0.0
  %84 = vmatpush1.msra.mxu0 %v17
  %85 = vmatprep.subr.mxu0 0.0
  %86 = vmatpush1.msra.mxu0 %v16
  %87 = vmatprep.subr.mxu0 0.0
  %88 = vmatpush2.msra.mxu0 %v47
  %89 = vmatprep.subr.mxu0 0.0
  %90 = vmatpush2.msra.mxu0 %v46
  %91 = vmatprep.subr.mxu0 0.0
  %92 = vmatpush2.msra.mxu0 %v45
  %93 = vmatprep.subr.mxu0 0.0
  %94 = vmatpush2.msra.mxu0 %v44
  %95 = vmatprep.subr.mxu0 0.0
  %96 = vmatpush2.msra.mxu0 %v43
  %97 = vmatprep.subr.mxu0 0.0
  %98 = vmatpush2.msra.mxu0 %v42
  %99 = vmatprep.subr.mxu0 0.0
  %100 = vmatpush2.msra.mxu0 %v41
  %101 = vmatprep.subr.mxu0 0.0
  %102 = vmatpush2.msra.mxu0 %v40
  %103 = vmatprep.subr.mxu0 0.0
  %104 = vmatpush2.msra.mxu0 %v39
  %105 = vmatprep.subr.mxu0 0.0
  %106 = vmatpush2.msra.mxu0 %v38
  %107 = vmatprep.subr.mxu0 0.0
  %108 = vmatpush2.msra.mxu0 %v37
  %109 = vmatprep.subr.mxu0 0.0
  %110 = vmatpush2.msra.mxu0 %v36
  %111 = vmatprep.subr.mxu0 0.0
  %112 = vmatpush2.msra.mxu0 %v35
  %113 = vmatprep.subr.mxu0 0.0
  %114 = vmatpush2.msra.mxu0 %v34
  %115 = vmatprep.subr.mxu0 0.0
  %116 = vmatpush2.msra.mxu0 %v33
  %117 = vmatprep.subr.mxu0 0.0
  %118 = vmatpush2.msra.mxu0 %v32
  %119 = vmatprep.mubr.f32.mxu0 %v15
  %120 = vmatmul.mubr.f32.gmra.mxu0 %v14
  %v121 = vpop.f32.mrf.mxu0
  %v122 = vadd.f32 %v53, %v121
  %v123 = vpop.f32.mrf.mxu0
  %124 = vdwg.mxu0
  %vm125 = vcmask 261120
  %126 = vst.msk [vmem:[%s3] sm:$0xff] %vm125, %v122
  // Predicated region
  $region14: #{_lambda_.8} parent=0 // pred_check
    _
  $region15: #{_lambda_.8} parent=0 // pred_check_branch
    %128 = sbr.rel (0) target = $region17
  $region16: #{_lambda_.8} parent=0 // pred_region
    _
  $region17: #{_lambda_.8} parent=0 // pred_fallthru
    _
  // Predicated region
  $region18: #{_lambda_.8} parent=0 // pred_check
    _
  $region19: #{_lambda_.8} parent=0 // pred_check_branch
    %130 = sbr.rel (0) target = $region21
  $region20: #{_lambda_.8} parent=0 // pred_region
    _
  $region21: #{_lambda_.8} parent=0 // pred_fallthru
    _

// kernel: _lambda_.9
$region0: #{_lambda_.9}
  #allocation0 [shape = 'u32[]', space=smem, size = 0x4, offset = 0x4, fixed_abs, tag = 'smem constant byte address 0x4 - core index']
  #allocation1 [shape = 'u32[144,128]{1,0:T(1,128)}', space=vmem, size = 0x12000, scoped, tag = 'internal scratch']
  %s0 = inlined_call_operand.vmem [shape: f32[8,288], index: 0, kind: input, shape index: {}]
  %s1 = inlined_call_operand.vmem [shape: f32[288,64], index: 1, kind: input, shape index: {}]
  %s2 = inlined_call_operand.vmem [shape: f32[1,64], index: 2, kind: input, shape index: {}]
  %s3 = inlined_call_operand.vmem [shape: f32[8,64], index: 3, kind: output, shape index: {}]
  %s4 = sld [smem:[#allocation0]]
  $region22: #{_lambda_.9} parent=0
    _
  %s6 = ssub.s32 1, %s4
  %s7 = scalar_select 0, %s6, %s4
  // Predicated region
  $region2: #{_lambda_.9} parent=0 // pred_check
    _
  $region3: #{_lambda_.9} parent=0 // pred_check_branch
    %9 = sbr.rel (0) target = $region5
  $region4: #{_lambda_.9} parent=0 // pred_region
    _
  $region5: #{_lambda_.9} parent=0 // pred_fallthru
    _
  // Predicated region
  $region6: #{_lambda_.9} parent=0 // pred_check
    _
  $region7: #{_lambda_.9} parent=0 // pred_check_branch
    %11 = sbr.rel (0) target = $region9
  $region8: #{_lambda_.9} parent=0 // pred_region
    _
  $region9: #{_lambda_.9} parent=0 // pred_fallthru
    _
  // Predicated region
  $region10: #{_lambda_.9} parent=0 // pred_check
    _
  $region11: #{_lambda_.9} parent=0 // pred_check_branch
    %13 = sbr.rel (0) target = $region13
  $region12: #{_lambda_.9} parent=0 // pred_region
    _
  $region13: #{_lambda_.9} parent=0 // pred_fallthru
    _
  %v14 = vld [vmem:[%s0] sm:$0xff]
  %v15 = vld [vmem:[%s0 + $0x8] sm:$0xff]
  %v16 = vld [vmem:[%s0 + $0x10] sm:$0xff]
  %v17 = vld [vmem:[%s1] sm:$0xff]
  %v18 = vld [vmem:[%s1 + $0x8] sm:$0xff]
  %v19 = vld [vmem:[%s1 + $0x10] sm:$0xff]
  %v20 = vld [vmem:[%s1 + $0x18] sm:$0xff]
  %v21 = vld [vmem:[%s1 + $0x20] sm:$0xff]
  %v22 = vld [vmem:[%s1 + $0x28] sm:$0xff]
  %v23 = vld [vmem:[%s1 + $0x30] sm:$0xff]
  %v24 = vld [vmem:[%s1 + $0x38] sm:$0xff]
  %v25 = vld [vmem:[%s1 + $0x40] sm:$0xff]
  %v26 = vld [vmem:[%s1 + $0x48] sm:$0xff]
  %v27 = vld [vmem:[%s1 + $0x50] sm:$0xff]
  %v28 = vld [vmem:[%s1 + $0x58] sm:$0xff]
  %v29 = vld [vmem:[%s1 + $0x60] sm:$0xff]
  %v30 = vld [vmem:[%s1 + $0x68] sm:$0xff]
  %v31 = vld [vmem:[%s1 + $0x70] sm:$0xff]
  %v32 = vld [vmem:[%s1 + $0x78] sm:$0xff]
  %v33 = vld [vmem:[%s1 + $0x80] sm:$0xff]
  %v34 = vld [vmem:[%s1 + $0x88] sm:$0xff]
  %v35 = vld [vmem:[%s1 + $0x90] sm:$0xff]
  %v36 = vld [vmem:[%s1 + $0x98] sm:$0xff]
  %v37 = vld [vmem:[%s1 + $0xa0] sm:$0xff]
  %v38 = vld [vmem:[%s1 + $0xa8] sm:$0xff]
  %v39 = vld [vmem:[%s1 + $0xb0] sm:$0xff]
  %v40 = vld [vmem:[%s1 + $0xb8] sm:$0xff]
  %v41 = vld [vmem:[%s1 + $0xc0] sm:$0xff]
  %v42 = vld [vmem:[%s1 + $0xc8] sm:$0xff]
  %v43 = vld [vmem:[%s1 + $0xd0] sm:$0xff]
  %v44 = vld [vmem:[%s1 + $0xd8] sm:$0xff]
  %v45 = vld [vmem:[%s1 + $0xe0] sm:$0xff]
  %v46 = vld [vmem:[%s1 + $0xe8] sm:$0xff]
  %v47 = vld [vmem:[%s1 + $0xf0] sm:$0xff]
  %v48 = vld [vmem:[%s1 + $0xf8] sm:$0xff]
  %v49 = vld [vmem:[%s1 + $0x100] sm:$0xff]
  %v50 = vld [vmem:[%s1 + $0x108] sm:$0xff]
  %v51 = vld [vmem:[%s1 + $0x110] sm:$0xff]
  %v52 = vld [vmem:[%s1 + $0x118] sm:$0xff]
  %v53 = vld [vmem:[%s2] sm:$0x1]
  %v55 = vlaneseq
  %v56 = vshrl.u32 %v55, 7
  %v57 = vsub.s32 0, %v56
  %v58 = vrot.slane %v53, %v57
  %vm60 = vcmask 261120
  %v62 = vsel %vm60, %v16, 0
  %64 = vmatprep.subr.mxu0 0.0
  %65 = vmatpush1.msra.mxu0 %v32
  %66 = vmatprep.subr.mxu0 0.0
  %67 = vmatpush1.msra.mxu0 %v31
  %68 = vmatprep.subr.mxu0 0.0
  %69 = vmatpush1.msra.mxu0 %v30
  %70 = vmatprep.subr.mxu0 0.0
  %71 = vmatpush1.msra.mxu0 %v29
  %72 = vmatprep.subr.mxu0 0.0
  %73 = vmatpush1.msra.mxu0 %v28
  %74 = vmatprep.subr.mxu0 0.0
  %75 = vmatpush1.msra.mxu0 %v27
  %76 = vmatprep.subr.mxu0 0.0
  %77 = vmatpush1.msra.mxu0 %v26
  %78 = vmatprep.subr.mxu0 0.0
  %79 = vmatpush1.msra.mxu0 %v25
  %80 = vmatprep.subr.mxu0 0.0
  %81 = vmatpush1.msra.mxu0 %v24
  %82 = vmatprep.subr.mxu0 0.0
  %83 = vmatpush1.msra.mxu0 %v23
  %84 = vmatprep.subr.mxu0 0.0
  %85 = vmatpush1.msra.mxu0 %v22
  %86 = vmatprep.subr.mxu0 0.0
  %87 = vmatpush1.msra.mxu0 %v21
  %88 = vmatprep.subr.mxu0 0.0
  %89 = vmatpush1.msra.mxu0 %v20
  %90 = vmatprep.subr.mxu0 0.0
  %91 = vmatpush1.msra.mxu0 %v19
  %92 = vmatprep.subr.mxu0 0.0
  %93 = vmatpush1.msra.mxu0 %v18
  %94 = vmatprep.subr.mxu0 0.0
  %95 = vmatpush1.msra.mxu0 %v17
  %96 = vmatprep.subr.mxu0 0.0
  %97 = vmatpush2.msra.mxu0 %v48
  %98 = vmatprep.subr.mxu0 0.0
  %99 = vmatpush2.msra.mxu0 %v47
  %100 = vmatprep.subr.mxu0 0.0
  %101 = vmatpush2.msra.mxu0 %v46
  %102 = vmatprep.subr.mxu0 0.0
  %103 = vmatpush2.msra.mxu0 %v45
  %104 = vmatprep.subr.mxu0 0.0
  %105 = vmatpush2.msra.mxu0 %v44
  %106 = vmatprep.subr.mxu0 0.0
  %107 = vmatpush2.msra.mxu0 %v43
  %108 = vmatprep.subr.mxu0 0.0
  %109 = vmatpush2.msra.mxu0 %v42
  %110 = vmatprep.subr.mxu0 0.0
  %111 = vmatpush2.msra.mxu0 %v41
  %112 = vmatprep.subr.mxu0 0.0
  %113 = vmatpush2.msra.mxu0 %v40
  %114 = vmatprep.subr.mxu0 0.0
  %115 = vmatpush2.msra.mxu0 %v39
  %116 = vmatprep.subr.mxu0 0.0
  %117 = vmatpush2.msra.mxu0 %v38
  %118 = vmatprep.subr.mxu0 0.0
  %119 = vmatpush2.msra.mxu0 %v37
  %120 = vmatprep.subr.mxu0 0.0
  %121 = vmatpush2.msra.mxu0 %v36
  %122 = vmatprep.subr.mxu0 0.0
  %123 = vmatpush2.msra.mxu0 %v35
  %124 = vmatprep.subr.mxu0 0.0
  %125 = vmatpush2.msra.mxu0 %v34
  %126 = vmatprep.subr.mxu0 0.0
  %127 = vmatpush2.msra.mxu0 %v33
  %128 = vmatprep.mubr.f32.mxu0 %v15
  %129 = vmatmul.mubr.f32.gmra.mxu0 %v14
  %v130 = vpop.f32.mrf.mxu0
  %v131 = vadd.f32 %v58, %v130
  %v132 = vpop.f32.mrf.mxu0
  %133 = vdwg.mxu0
  %134 = vmatprep.subr.mxu0 0.0
  %135 = vmatpush1.msra.mxu0 0.0
  %136 = vmatprep.subr.mxu0 0.0
  %137 = vmatpush1.msra.mxu0 0.0
  %138 = vmatprep.subr.mxu0 0.0
  %139 = vmatpush1.msra.mxu0 0.0
  %140 = vmatprep.subr.mxu0 0.0
  %141 = vmatpush1.msra.mxu0 0.0
  %142 = vmatprep.subr.mxu0 0.0
  %143 = vmatpush1.msra.mxu0 0.0
  %144 = vmatprep.subr.mxu0 0.0
  %145 = vmatpush1.msra.mxu0 0.0
  %146 = vmatprep.subr.mxu0 0.0
  %147 = vmatpush1.msra.mxu0 0.0
  %148 = vmatprep.subr.mxu0 0.0
  %149 = vmatpush1.msra.mxu0 0.0
  %150 = vmatprep.subr.mxu0 0.0
  %151 = vmatpush1.msra.mxu0 0.0
  %152 = vmatprep.subr.mxu0 0.0
  %153 = vmatpush1.msra.mxu0 0.0
  %154 = vmatprep.subr.mxu0 0.0
  %155 = vmatpush1.msra.mxu0 0.0
  %156 = vmatprep.subr.mxu0 0.0
  %157 = vmatpush1.msra.mxu0 0.0
  %158 = vmatprep.subr.mxu0 0.0
  %159 = vmatpush1.msra.mxu0 %v52
  %160 = vmatprep.subr.mxu0 0.0
  %161 = vmatpush1.msra.mxu0 %v51
  %162 = vmatprep.subr.mxu0 0.0
  %163 = vmatpush1.msra.mxu0 %v50
  %164 = vmatprep.subr.mxu0 0.0
  %165 = vmatpush1.msra.mxu0 %v49
  %166 = vmatprep.subr.mxu0 0.0
  %167 = vmatpush2.msra.mxu0 0.0
  %168 = vmatprep.subr.mxu0 0.0
  %169 = vmatpush2.msra.mxu0 0.0
  %170 = vmatprep.subr.mxu0 0.0
  %171 = vmatpush2.msra.mxu0 0.0
  %172 = vmatprep.subr.mxu0 0.0
  %173 = vmatpush2.msra.mxu0 0.0
  %174 = vmatprep.subr.mxu0 0.0
  %175 = vmatpush2.msra.mxu0 0.0
  %176 = vmatprep.subr.mxu0 0.0
  %177 = vmatpush2.msra.mxu0 0.0
  %178 = vmatprep.subr.mxu0 0.0
  %179 = vmatpush2.msra.mxu0 0.0
  %180 = vmatprep.subr.mxu0 0.0
  %181 = vmatpush2.msra.mxu0 0.0
  %182 = vmatprep.subr.mxu0 0.0
  %183 = vmatpush2.msra.mxu0 0.0
  %184 = vmatprep.subr.mxu0 0.0
  %185 = vmatpush2.msra.mxu0 0.0
  %186 = vmatprep.subr.mxu0 0.0
  %187 = vmatpush2.msra.mxu0 0.0
  %188 = vmatprep.subr.mxu0 0.0
  %189 = vmatpush2.msra.mxu0 0.0
  %190 = vmatprep.subr.mxu0 0.0
  %191 = vmatpush2.msra.mxu0 0.0
  %192 = vmatprep.subr.mxu0 0.0
  %193 = vmatpush2.msra.mxu0 0.0
  %194 = vmatprep.subr.mxu0 0.0
  %195 = vmatpush2.msra.mxu0 0.0
  %196 = vmatprep.subr.mxu0 0.0
  %197 = vmatpush2.msra.mxu0 0.0
  %198 = vmatprep.mubr.f32.mxu0 0.0
  %199 = vmatmul.mubr.f32.gmra.mxu0 %v62
  %v200 = vpop.f32.mrf.mxu0
  %v201 = vadd.f32 %v131, %v200
  %v202 = vpop.f32.mrf.mxu0
  %203 = vdwg.mxu0
  %vm204 = vcmask 523264
  %205 = vst.msk [vmem:[%s3] sm:$0xff] %vm204, %v201
  // Predicated region
  $region14: #{_lambda_.9} parent=0 // pred_check
    _
  $region15: #{_lambda_.9} parent=0 // pred_check_branch
    %207 = sbr.rel (0) target = $region17
  $region16: #{_lambda_.9} parent=0 // pred_region
    _
  $region17: #{_lambda_.9} parent=0 // pred_fallthru
    _
  // Predicated region
  $region18: #{_lambda_.9} parent=0 // pred_check
    _
  $region19: #{_lambda_.9} parent=0 // pred_check_branch
    %209 = sbr.rel (0) target = $region21
  $region20: #{_lambda_.9} parent=0 // pred_region
    _
  $region21: #{_lambda_.9} parent=0 // pred_fallthru
    _

// kernel: _lambda_.10
$region0: #{_lambda_.10}
  #allocation0 [shape = 'u32[]', space=smem, size = 0x4, offset = 0x4, fixed_abs, tag = 'smem constant byte address 0x4 - core index']
  #allocation1 [shape = 'u32[144,128]{1,0:T(1,128)}', space=vmem, size = 0x12000, scoped, tag = 'internal scratch']
  %s0 = inlined_call_operand.vmem [shape: f32[32,144], index: 0, kind: input, shape index: {}]
  %s1 = inlined_call_operand.vmem [shape: f32[32,144], index: 1, kind: input, shape index: {}]
  %s2 = inlined_call_operand.vmem [shape: f32[144,32], index: 2, kind: input, shape index: {}]
  %s3 = inlined_call_operand.vmem [shape: f32[144,32], index: 3, kind: input, shape index: {}]
  %s4 = inlined_call_operand.vmem [shape: f32[1,32], index: 4, kind: input, shape index: {}]
  %s5 = inlined_call_operand.vmem [shape: f32[32,32], index: 5, kind: output, shape index: {}]
  %s6 = sld [smem:[#allocation0]]
  $region30: #{_lambda_.10} parent=0
    _
  %s8 = ssub.s32 1, %s6
  %s9 = scalar_select 0, %s8, %s6
  // Predicated region
  $region2: #{_lambda_.10} parent=0 // pred_check
    _
  $region3: #{_lambda_.10} parent=0 // pred_check_branch
    %11 = sbr.rel (0) target = $region5
  $region4: #{_lambda_.10} parent=0 // pred_region
    _
  $region5: #{_lambda_.10} parent=0 // pred_fallthru
    _
  // Predicated region
  $region6: #{_lambda_.10} parent=0 // pred_check
    _
  $region7: #{_lambda_.10} parent=0 // pred_check_branch
    %13 = sbr.rel (0) target = $region9
  $region8: #{_lambda_.10} parent=0 // pred_region
    _
  $region9: #{_lambda_.10} parent=0 // pred_fallthru
    _
  // Predicated region
  $region10: #{_lambda_.10} parent=0 // pred_check
    _
  $region11: #{_lambda_.10} parent=0 // pred_check_branch
    %15 = sbr.rel (0) target = $region13
  $region12: #{_lambda_.10} parent=0 // pred_region
    _
  $region13: #{_lambda_.10} parent=0 // pred_fallthru
    _
  // Predicated region
  $region14: #{_lambda_.10} parent=0 // pred_check
    _
  $region15: #{_lambda_.10} parent=0 // pred_check_branch
    %17 = sbr.rel (0) target = $region17
  $region16: #{_lambda_.10} parent=0 // pred_region
    _
  $region17: #{_lambda_.10} parent=0 // pred_fallthru
    _
  // Predicated region
  $region18: #{_lambda_.10} parent=0 // pred_check
    _
  $region19: #{_lambda_.10} parent=0 // pred_check_branch
    %19 = sbr.rel (0) target = $region21
  $region20: #{_lambda_.10} parent=0 // pred_region
    _
  $region21: #{_lambda_.10} parent=0 // pred_fallthru
    _
  %v20 = vld [vmem:[%s0] sm:$0xff]
  %v21 = vld [vmem:[%s0 + $0x8] sm:$0xff]
  %v22 = vld [vmem:[%s0 + $0x10] sm:$0xff]
  %v23 = vld [vmem:[%s0 + $0x18] sm:$0xff]
  %v24 = vld [vmem:[%s0 + $0x20] sm:$0xff]
  %v25 = vld [vmem:[%s0 + $0x28] sm:$0xff]
  %v26 = vld [vmem:[%s0 + $0x30] sm:$0xff]
  %v27 = vld [vmem:[%s0 + $0x38] sm:$0xff]
  %v28 = vld [vmem:[%s2] sm:$0xff]
  %v29 = vld [vmem:[%s2 + $0x8] sm:$0xff]
  %v30 = vld [vmem:[%s2 + $0x10] sm:$0xff]
  %v31 = vld [vmem:[%s2 + $0x18] sm:$0xff]
  %v32 = vld [vmem:[%s2 + $0x20] sm:$0xff]
  %v33 = vld [vmem:[%s2 + $0x28] sm:$0xff]
  %v34 = vld [vmem:[%s2 + $0x30] sm:$0xff]
  %v35 = vld [vmem:[%s2 + $0x38] sm:$0xff]
  %v36 = vld [vmem:[%s2 + $0x40] sm:$0xff]
  %v37 = vld [vmem:[%s2 + $0x48] sm:$0xff]
  %v38 = vld [vmem:[%s2 + $0x50] sm:$0xff]
  %v39 = vld [vmem:[%s2 + $0x58] sm:$0xff]
  %v40 = vld [vmem:[%s2 + $0x60] sm:$0xff]
  %v41 = vld [vmem:[%s2 + $0x68] sm:$0xff]
  %v42 = vld [vmem:[%s2 + $0x70] sm:$0xff]
  %v43 = vld [vmem:[%s2 + $0x78] sm:$0xff]
  %v44 = vld [vmem:[%s2 + $0x80] sm:$0xff]
  %v45 = vld [vmem:[%s2 + $0x88] sm:$0xff]
  %v46 = vld [vmem:[%s1] sm:$0xff]
  %v47 = vld [vmem:[%s1 + $0x8] sm:$0xff]
  %v48 = vld [vmem:[%s1 + $0x10] sm:$0xff]
  %v49 = vld [vmem:[%s1 + $0x18] sm:$0xff]
  %v50 = vld [vmem:[%s1 + $0x20] sm:$0xff]
  %v51 = vld [vmem:[%s1 + $0x28] sm:$0xff]
  %v52 = vld [vmem:[%s1 + $0x30] sm:$0xff]
  %v53 = vld [vmem:[%s1 + $0x38] sm:$0xff]
  %v54 = vld [vmem:[%s3] sm:$0xff]
  %v55 = vld [vmem:[%s3 + $0x8] sm:$0xff]
  %v56 = vld [vmem:[%s3 + $0x10] sm:$0xff]
  %v57 = vld [vmem:[%s3 + $0x18] sm:$0xff]
  %v58 = vld [vmem:[%s3 + $0x20] sm:$0xff]
  %v59 = vld [vmem:[%s3 + $0x28] sm:$0xff]
  %v60 = vld [vmem:[%s3 + $0x30] sm:$0xff]
  %v61 = vld [vmem:[%s3 + $0x38] sm:$0xff]
  %v62 = vld [vmem:[%s3 + $0x40] sm:$0xff]
  %v63 = vld [vmem:[%s3 + $0x48] sm:$0xff]
  %v64 = vld [vmem:[%s3 + $0x50] sm:$0xff]
  %v65 = vld [vmem:[%s3 + $0x58] sm:$0xff]
  %v66 = vld [vmem:[%s3 + $0x60] sm:$0xff]
  %v67 = vld [vmem:[%s3 + $0x68] sm:$0xff]
  %v68 = vld [vmem:[%s3 + $0x70] sm:$0xff]
  %v69 = vld [vmem:[%s3 + $0x78] sm:$0xff]
  %v70 = vld [vmem:[%s3 + $0x80] sm:$0xff]
  %v71 = vld [vmem:[%s3 + $0x88] sm:$0xff]
  %vm72 = vcmask 130048
  %v74 = vsel %vm72, %v47, 0
  %v77 = vsel %vm72, %v49, 0
  %v80 = vsel %vm72, %v51, 0
  %v83 = vsel %vm72, %v53, 0
  %85 = vmatprep.subr.mxu0 0.0
  %86 = vmatpush1.msra.mxu0 %v69
  %87 = vmatprep.subr.mxu0 0.0
  %88 = vmatpush1.msra.mxu0 %v68
  %89 = vmatprep.subr.mxu0 0.0
  %90 = vmatpush1.msra.mxu0 %v67
  %91 = vmatprep.subr.mxu0 0.0
  %92 = vmatpush1.msra.mxu0 %v66
  %93 = vmatprep.subr.mxu0 0.0
  %94 = vmatpush1.msra.mxu0 %v65
  %95 = vmatprep.subr.mxu0 0.0
  %96 = vmatpush1.msra.mxu0 %v64
  %97 = vmatprep.subr.mxu0 0.0
  %98 = vmatpush1.msra.mxu0 %v63
  %99 = vmatprep.subr.mxu0 0.0
  %100 = vmatpush1.msra.mxu0 %v62
  %101 = vmatprep.subr.mxu0 0.0
  %102 = vmatpush1.msra.mxu0 %v61
  %103 = vmatprep.subr.mxu0 0.0
  %104 = vmatpush1.msra.mxu0 %v60
  %105 = vmatprep.subr.mxu0 0.0
  %106 = vmatpush1.msra.mxu0 %v59
  %107 = vmatprep.subr.mxu0 0.0
  %108 = vmatpush1.msra.mxu0 %v58
  %109 = vmatprep.subr.mxu0 0.0
  %110 = vmatpush1.msra.mxu0 %v57
  %111 = vmatprep.subr.mxu0 0.0
  %112 = vmatpush1.msra.mxu0 %v56
  %113 = vmatprep.subr.mxu0 0.0
  %114 = vmatpush1.msra.mxu0 %v55
  %115 = vmatprep.subr.mxu0 0.0
  %116 = vmatpush1.msra.mxu0 %v54
  %117 = vmatprep.subr.mxu0 0.0
  %118 = vmatpush2.msra.mxu0 0.0
  %119 = vmatprep.subr.mxu0 0.0
  %120 = vmatpush2.msra.mxu0 0.0
  %121 = vmatprep.subr.mxu0 0.0
  %122 = vmatpush2.msra.mxu0 0.0
  %123 = vmatprep.subr.mxu0 0.0
  %124 = vmatpush2.msra.mxu0 0.0
  %125 = vmatprep.subr.mxu0 0.0
  %126 = vmatpush2.msra.mxu0 0.0
  %127 = vmatprep.subr.mxu0 0.0
  %128 = vmatpush2.msra.mxu0 0.0
  %129 = vmatprep.subr.mxu0 0.0
  %130 = vmatpush2.msra.mxu0 0.0
  %131 = vmatprep.subr.mxu0 0.0
  %132 = vmatpush2.msra.mxu0 0.0
  %133 = vmatprep.subr.mxu0 0.0
  %134 = vmatpush2.msra.mxu0 0.0
  %135 = vmatprep.subr.mxu0 0.0
  %136 = vmatpush2.msra.mxu0 0.0
  %137 = vmatprep.subr.mxu0 0.0
  %138 = vmatpush2.msra.mxu0 0.0
  %139 = vmatprep.subr.mxu0 0.0
  %140 = vmatpush2.msra.mxu0 0.0
  %141 = vmatprep.subr.mxu0 0.0
  %142 = vmatpush2.msra.mxu0 0.0
  %143 = vmatprep.subr.mxu0 0.0
  %144 = vmatpush2.msra.mxu0 0.0
  %145 = vmatprep.subr.mxu0 0.0
  %146 = vmatpush2.msra.mxu0 %v71
  %147 = vmatprep.subr.mxu0 0.0
  %148 = vmatpush2.msra.mxu0 %v70
  %149 = vmatprep.mubr.f32.mxu0 %v74
  %150 = vmatmul.mubr.f32.gmra.mxu0 %v46
  %v151 = vpop.f32.mrf.mxu0
  %v152 = vadd.f32 0.0, %v151
  %v153 = vpop.f32.mrf.mxu0
  %154 = vmatprep.mubr.f32.mxu0 %v77
  %155 = vmatmul.mubr.f32.gmra.mxu0 %v48
  %v156 = vpop.f32.mrf.mxu0
  %v157 = vadd.f32 0.0, %v156
  %v158 = vpop.f32.mrf.mxu0
  %159 = vmatprep.mubr.f32.mxu0 %v80
  %160 = vmatmul.mubr.f32.gmra.mxu0 %v50
  %v161 = vpop.f32.mrf.mxu0
  %v162 = vadd.f32 0.0, %v161
  %v163 = vpop.f32.mrf.mxu0
  %164 = vmatprep.mubr.f32.mxu0 %v83
  %165 = vmatmul.mubr.f32.gmra.mxu0 %v52
  %v166 = vpop.f32.mrf.mxu0
  %v167 = vadd.f32 0.0, %v166
  %v168 = vpop.f32.mrf.mxu0
  %169 = vdwg.mxu0
  %v171 = vsel %vm72, %v21, 0
  %v174 = vsel %vm72, %v23, 0
  %v177 = vsel %vm72, %v25, 0
  %v180 = vsel %vm72, %v27, 0
  %182 = vmatprep.subr.mxu0 0.0
  %183 = vmatpush1.msra.mxu0 %v43
  %184 = vmatprep.subr.mxu0 0.0
  %185 = vmatpush1.msra.mxu0 %v42
  %186 = vmatprep.subr.mxu0 0.0
  %187 = vmatpush1.msra.mxu0 %v41
  %188 = vmatprep.subr.mxu0 0.0
  %189 = vmatpush1.msra.mxu0 %v40
  %190 = vmatprep.subr.mxu0 0.0
  %191 = vmatpush1.msra.mxu0 %v39
  %192 = vmatprep.subr.mxu0 0.0
  %193 = vmatpush1.msra.mxu0 %v38
  %194 = vmatprep.subr.mxu0 0.0
  %195 = vmatpush1.msra.mxu0 %v37
  %196 = vmatprep.subr.mxu0 0.0
  %197 = vmatpush1.msra.mxu0 %v36
  %198 = vmatprep.subr.mxu0 0.0
  %199 = vmatpush1.msra.mxu0 %v35
  %200 = vmatprep.subr.mxu0 0.0
  %201 = vmatpush1.msra.mxu0 %v34
  %202 = vmatprep.subr.mxu0 0.0
  %203 = vmatpush1.msra.mxu0 %v33
  %204 = vmatprep.subr.mxu0 0.0
  %205 = vmatpush1.msra.mxu0 %v32
  %206 = vmatprep.subr.mxu0 0.0
  %207 = vmatpush1.msra.mxu0 %v31
  %208 = vmatprep.subr.mxu0 0.0
  %209 = vmatpush1.msra.mxu0 %v30
  %210 = vmatprep.subr.mxu0 0.0
  %211 = vmatpush1.msra.mxu0 %v29
  %212 = vmatprep.subr.mxu0 0.0
  %213 = vmatpush1.msra.mxu0 %v28
  %214 = vmatprep.subr.mxu0 0.0
  %215 = vmatpush2.msra.mxu0 0.0
  %216 = vmatprep.subr.mxu0 0.0
  %217 = vmatpush2.msra.mxu0 0.0
  %218 = vmatprep.subr.mxu0 0.0
  %219 = vmatpush2.msra.mxu0 0.0
  %220 = vmatprep.subr.mxu0 0.0
  %221 = vmatpush2.msra.mxu0 0.0
  %222 = vmatprep.subr.mxu0 0.0
  %223 = vmatpush2.msra.mxu0 0.0
  %224 = vmatprep.subr.mxu0 0.0
  %225 = vmatpush2.msra.mxu0 0.0
  %226 = vmatprep.subr.mxu0 0.0
  %227 = vmatpush2.msra.mxu0 0.0
  %228 = vmatprep.subr.mxu0 0.0
  %229 = vmatpush2.msra.mxu0 0.0
  %230 = vmatprep.subr.mxu0 0.0
  %231 = vmatpush2.msra.mxu0 0.0
  %232 = vmatprep.subr.mxu0 0.0
  %233 = vmatpush2.msra.mxu0 0.0
  %234 = vmatprep.subr.mxu0 0.0
  %235 = vmatpush2.msra.mxu0 0.0
  %236 = vmatprep.subr.mxu0 0.0
  %237 = vmatpush2.msra.mxu0 0.0
  %238 = vmatprep.subr.mxu0 0.0
  %239 = vmatpush2.msra.mxu0 0.0
  %240 = vmatprep.subr.mxu0 0.0
  %241 = vmatpush2.msra.mxu0 0.0
  %242 = vmatprep.subr.mxu0 0.0
  %243 = vmatpush2.msra.mxu0 %v45
  %244 = vmatprep.subr.mxu0 0.0
  %245 = vmatpush2.msra.mxu0 %v44
  %246 = vmatprep.mubr.f32.mxu0 %v171
  %247 = vmatmul.mubr.f32.gmra.mxu0 %v20
  %v248 = vpop.f32.mrf.mxu0
  %v249 = vadd.f32 %v152, %v248
  %v250 = vpop.f32.mrf.mxu0
  %251 = vmatprep.mubr.f32.mxu0 %v174
  %252 = vmatmul.mubr.f32.gmra.mxu0 %v22
  %v253 = vpop.f32.mrf.mxu0
  %v254 = vadd.f32 %v157, %v253
  %v255 = vpop.f32.mrf.mxu0
  %256 = vmatprep.mubr.f32.mxu0 %v177
  %257 = vmatmul.mubr.f32.gmra.mxu0 %v24
  %v258 = vpop.f32.mrf.mxu0
  %v259 = vadd.f32 %v162, %v258
  %v260 = vpop.f32.mrf.mxu0
  %261 = vmatprep.mubr.f32.mxu0 %v180
  %262 = vmatmul.mubr.f32.gmra.mxu0 %v26
  %v263 = vpop.f32.mrf.mxu0
  %v264 = vadd.f32 %v167, %v263
  %v265 = vpop.f32.mrf.mxu0
  %266 = vdwg.mxu0
  %v267 = vld [vmem:[%s4] sm:$0x1]
  %v269 = vlaneseq
  %v270 = vshrl.u32 %v269, 7
  %v271 = vsub.s32 0, %v270
  %v272 = vrot.slane %v267, %v271
  %v274 = vadd.f32 %v249, %v272
  %v275 = vadd.f32 %v254, %v272
  %v276 = vadd.f32 %v259, %v272
  %v277 = vadd.f32 %v264, %v272
  %vm278 = vcmask 261120
  %279 = vst.msk [vmem:[%s5] sm:$0xff] %vm278, %v274
  %280 = vst.msk [vmem:[%s5 + $0x8] sm:$0xff] %vm278, %v275
  %281 = vst.msk [vmem:[%s5 + $0x10] sm:$0xff] %vm278, %v276
  %282 = vst.msk [vmem:[%s5 + $0x18] sm:$0xff] %vm278, %v277
  // Predicated region
  $region22: #{_lambda_.10} parent=0 // pred_check
    _
  $region23: #{_lambda_.10} parent=0 // pred_check_branch
    %284 = sbr.rel (0) target = $region25
  $region24: #{_lambda_.10} parent=0 // pred_region
    _
  $region25: #{_lambda_.10} parent=0 // pred_fallthru
    _
  // Predicated region
  $region26: #{_lambda_.10} parent=0 // pred_check
    _
  $region27: #{_lambda_.10} parent=0 // pred_check_branch
    %286 = sbr.rel (0) target = $region29
  $region28: #{_lambda_.10} parent=0 // pred_region
    _
  $region29: #{_lambda_.10} parent=0 // pred_fallthru
    _

// kernel: _lambda_.11
$region0: #{_lambda_.11}
  #allocation0 [shape = 'u32[]', space=smem, size = 0x4, offset = 0x4, fixed_abs, tag = 'smem constant byte address 0x4 - core index']
  #allocation1 [shape = 'u32[144,128]{1,0:T(1,128)}', space=vmem, size = 0x12000, scoped, tag = 'internal scratch']
  %s0 = inlined_call_operand.vmem [shape: f32[128,72], index: 0, kind: input, shape index: {}]
  %s1 = inlined_call_operand.vmem [shape: f32[128,72], index: 1, kind: input, shape index: {}]
  %s2 = inlined_call_operand.vmem [shape: f32[72,12], index: 2, kind: input, shape index: {}]
  %s3 = inlined_call_operand.vmem [shape: f32[72,12], index: 3, kind: input, shape index: {}]
  %s4 = inlined_call_operand.vmem [shape: f32[1,12], index: 4, kind: input, shape index: {}]
  %s5 = inlined_call_operand.vmem [shape: f32[128,12], index: 5, kind: output, shape index: {}]
  %s6 = sld [smem:[#allocation0]]
  $region30: #{_lambda_.11} parent=0
    _
  %s8 = ssub.s32 1, %s6
  %s9 = scalar_select 0, %s8, %s6
  // Predicated region
  $region2: #{_lambda_.11} parent=0 // pred_check
    _
  $region3: #{_lambda_.11} parent=0 // pred_check_branch
    %11 = sbr.rel (0) target = $region5
  $region4: #{_lambda_.11} parent=0 // pred_region
    _
  $region5: #{_lambda_.11} parent=0 // pred_fallthru
    _
  // Predicated region
  $region6: #{_lambda_.11} parent=0 // pred_check
    _
  $region7: #{_lambda_.11} parent=0 // pred_check_branch
    %13 = sbr.rel (0) target = $region9
  $region8: #{_lambda_.11} parent=0 // pred_region
    _
  $region9: #{_lambda_.11} parent=0 // pred_fallthru
    _
  // Predicated region
  $region10: #{_lambda_.11} parent=0 // pred_check
    _
  $region11: #{_lambda_.11} parent=0 // pred_check_branch
    %15 = sbr.rel (0) target = $region13
  $region12: #{_lambda_.11} parent=0 // pred_region
    _
  $region13: #{_lambda_.11} parent=0 // pred_fallthru
    _
  // Predicated region
  $region14: #{_lambda_.11} parent=0 // pred_check
    _
  $region15: #{_lambda_.11} parent=0 // pred_check_branch
    %17 = sbr.rel (0) target = $region17
  $region16: #{_lambda_.11} parent=0 // pred_region
    _
  $region17: #{_lambda_.11} parent=0 // pred_fallthru
    _
  // Predicated region
  $region18: #{_lambda_.11} parent=0 // pred_check
    _
  $region19: #{_lambda_.11} parent=0 // pred_check_branch
    %19 = sbr.rel (0) target = $region21
  $region20: #{_lambda_.11} parent=0 // pred_region
    _
  $region21: #{_lambda_.11} parent=0 // pred_fallthru
    _
  %v20 = vld [vmem:[%s0] sm:$0xff]
  %v21 = vld [vmem:[%s0 + $0x8] sm:$0xff]
  %v22 = vld [vmem:[%s0 + $0x10] sm:$0xff]
  %v23 = vld [vmem:[%s0 + $0x18] sm:$0xff]
  %v24 = vld [vmem:[%s0 + $0x20] sm:$0xff]
  %v25 = vld [vmem:[%s0 + $0x28] sm:$0xff]
  %v26 = vld [vmem:[%s0 + $0x30] sm:$0xff]
  %v27 = vld [vmem:[%s0 + $0x38] sm:$0xff]
  %v28 = vld [vmem:[%s0 + $0x40] sm:$0xff]
  %v29 = vld [vmem:[%s0 + $0x48] sm:$0xff]
  %v30 = vld [vmem:[%s0 + $0x50] sm:$0xff]
  %v31 = vld [vmem:[%s0 + $0x58] sm:$0xff]
  %v32 = vld [vmem:[%s0 + $0x60] sm:$0xff]
  %v33 = vld [vmem:[%s0 + $0x68] sm:$0xff]
  %v34 = vld [vmem:[%s0 + $0x70] sm:$0xff]
  %v35 = vld [vmem:[%s0 + $0x78] sm:$0xff]
  %v36 = vld [vmem:[%s2] sm:$0xff]
  %v37 = vld [vmem:[%s2 + $0x8] sm:$0xff]
  %v38 = vld [vmem:[%s2 + $0x10] sm:$0xff]
  %v39 = vld [vmem:[%s2 + $0x18] sm:$0xff]
  %v40 = vld [vmem:[%s2 + $0x20] sm:$0xff]
  %v41 = vld [vmem:[%s2 + $0x28] sm:$0xff]
  %v42 = vld [vmem:[%s2 + $0x30] sm:$0xff]
  %v43 = vld [vmem:[%s2 + $0x38] sm:$0xff]
  %v44 = vld [vmem:[%s2 + $0x40] sm:$0xff]
  %v45 = vld [vmem:[%s1] sm:$0xff]
  %v46 = vld [vmem:[%s1 + $0x8] sm:$0xff]
  %v47 = vld [vmem:[%s1 + $0x10] sm:$0xff]
  %v48 = vld [vmem:[%s1 + $0x18] sm:$0xff]
  %v49 = vld [vmem:[%s1 + $0x20] sm:$0xff]
  %v50 = vld [vmem:[%s1 + $0x28] sm:$0xff]
  %v51 = vld [vmem:[%s1 + $0x30] sm:$0xff]
  %v52 = vld [vmem:[%s1 + $0x38] sm:$0xff]
  %v53 = vld [vmem:[%s1 + $0x40] sm:$0xff]
  %v54 = vld [vmem:[%s1 + $0x48] sm:$0xff]
  %v55 = vld [vmem:[%s1 + $0x50] sm:$0xff]
  %v56 = vld [vmem:[%s1 + $0x58] sm:$0xff]
  %v57 = vld [vmem:[%s1 + $0x60] sm:$0xff]
  %v58 = vld [vmem:[%s1 + $0x68] sm:$0xff]
  %v59 = vld [vmem:[%s1 + $0x70] sm:$0xff]
  %v60 = vld [vmem:[%s1 + $0x78] sm:$0xff]
  %v61 = vld [vmem:[%s3] sm:$0xff]
  %v62 = vld [vmem:[%s3 + $0x8] sm:$0xff]
  %v63 = vld [vmem:[%s3 + $0x10] sm:$0xff]
  %v64 = vld [vmem:[%s3 + $0x18] sm:$0xff]
  %v65 = vld [vmem:[%s3 + $0x20] sm:$0xff]
  %v66 = vld [vmem:[%s3 + $0x28] sm:$0xff]
  %v67 = vld [vmem:[%s3 + $0x30] sm:$0xff]
  %v68 = vld [vmem:[%s3 + $0x38] sm:$0xff]
  %v69 = vld [vmem:[%s3 + $0x40] sm:$0xff]
  %vm70 = vcmask 588800
  %v72 = vsel %vm70, %v45, 0
  %v75 = vsel %vm70, %v46, 0
  %v78 = vsel %vm70, %v47, 0
  %v81 = vsel %vm70, %v48, 0
  %v84 = vsel %vm70, %v49, 0
  %v87 = vsel %vm70, %v50, 0
  %v90 = vsel %vm70, %v51, 0
  %v93 = vsel %vm70, %v52, 0
  %v96 = vsel %vm70, %v53, 0
  %v99 = vsel %vm70, %v54, 0
  %v102 = vsel %vm70, %v55, 0
  %v105 = vsel %vm70, %v56, 0
  %v108 = vsel %vm70, %v57, 0
  %v111 = vsel %vm70, %v58, 0
  %v114 = vsel %vm70, %v59, 0
  %v117 = vsel %vm70, %v60, 0
  %119 = vmatprep.subr.mxu0 0.0
  %120 = vmatpush1.msra.mxu0 0.0
  %121 = vmatprep.subr.mxu0 0.0
  %122 = vmatpush1.msra.mxu0 0.0
  %123 = vmatprep.subr.mxu0 0.0
  %124 = vmatpush1.msra.mxu0 0.0
  %125 = vmatprep.subr.mxu0 0.0
  %126 = vmatpush1.msra.mxu0 0.0
  %127 = vmatprep.subr.mxu0 0.0
  %128 = vmatpush1.msra.mxu0 0.0
  %129 = vmatprep.subr.mxu0 0.0
  %130 = vmatpush1.msra.mxu0 0.0
  %131 = vmatprep.subr.mxu0 0.0
  %132 = vmatpush1.msra.mxu0 0.0
  %133 = vmatprep.subr.mxu0 0.0
  %134 = vmatpush1.msra.mxu0 %v69
  %135 = vmatprep.subr.mxu0 0.0
  %136 = vmatpush1.msra.mxu0 %v68
  %137 = vmatprep.subr.mxu0 0.0
  %138 = vmatpush1.msra.mxu0 %v67
  %139 = vmatprep.subr.mxu0 0.0
  %140 = vmatpush1.msra.mxu0 %v66
  %141 = vmatprep.subr.mxu0 0.0
  %142 = vmatpush1.msra.mxu0 %v65
  %143 = vmatprep.subr.mxu0 0.0
  %144 = vmatpush1.msra.mxu0 %v64
  %145 = vmatprep.subr.mxu0 0.0
  %146 = vmatpush1.msra.mxu0 %v63
  %147 = vmatprep.subr.mxu0 0.0
  %148 = vmatpush1.msra.mxu0 %v62
  %149 = vmatprep.subr.mxu0 0.0
  %150 = vmatpush1.msra.mxu0 %v61
  %151 = vmatprep.subr.mxu0 0.0
  %152 = vmatpush2.msra.mxu0 0.0
  %153 = vmatprep.subr.mxu0 0.0
  %154 = vmatpush2.msra.mxu0 0.0
  %155 = vmatprep.subr.mxu0 0.0
  %156 = vmatpush2.msra.mxu0 0.0
  %157 = vmatprep.subr.mxu0 0.0
  %158 = vmatpush2.msra.mxu0 0.0
  %159 = vmatprep.subr.mxu0 0.0
  %160 = vmatpush2.msra.mxu0 0.0
  %161 = vmatprep.subr.mxu0 0.0
  %162 = vmatpush2.msra.mxu0 0.0
  %163 = vmatprep.subr.mxu0 0.0
  %164 = vmatpush2.msra.mxu0 0.0
  %165 = vmatprep.subr.mxu0 0.0
  %166 = vmatpush2.msra.mxu0 0.0
  %167 = vmatprep.subr.mxu0 0.0
  %168 = vmatpush2.msra.mxu0 0.0
  %169 = vmatprep.subr.mxu0 0.0
  %170 = vmatpush2.msra.mxu0 0.0
  %171 = vmatprep.subr.mxu0 0.0
  %172 = vmatpush2.msra.mxu0 0.0
  %173 = vmatprep.subr.mxu0 0.0
  %174 = vmatpush2.msra.mxu0 0.0
  %175 = vmatprep.subr.mxu0 0.0
  %176 = vmatpush2.msra.mxu0 0.0
  %177 = vmatprep.subr.mxu0 0.0
  %178 = vmatpush2.msra.mxu0 0.0
  %179 = vmatprep.subr.mxu0 0.0
  %180 = vmatpush2.msra.mxu0 0.0
  %181 = vmatprep.subr.mxu0 0.0
  %182 = vmatpush2.msra.mxu0 0.0
  %183 = vmatprep.mubr.f32.mxu0 0.0
  %184 = vmatmul.mubr.f32.gmra.mxu0 %v72
  %v185 = vpop.f32.mrf.mxu0
  %v186 = vadd.f32 0.0, %v185
  %v187 = vpop.f32.mrf.mxu0
  %188 = vmatprep.mubr.f32.mxu0 0.0
  %189 = vmatmul.mubr.f32.gmra.mxu0 %v75
  %v190 = vpop.f32.mrf.mxu0
  %v191 = vadd.f32 0.0, %v190
  %v192 = vpop.f32.mrf.mxu0
  %193 = vmatprep.mubr.f32.mxu0 0.0
  %194 = vmatmul.mubr.f32.gmra.mxu0 %v78
  %v195 = vpop.f32.mrf.mxu0
  %v196 = vadd.f32 0.0, %v195
  %v197 = vpop.f32.mrf.mxu0
  %198 = vmatprep.mubr.f32.mxu0 0.0
  %199 = vmatmul.mubr.f32.gmra.mxu0 %v81
  %v200 = vpop.f32.mrf.mxu0
  %v201 = vadd.f32 0.0, %v200
  %v202 = vpop.f32.mrf.mxu0
  %203 = vmatprep.mubr.f32.mxu0 0.0
  %204 = vmatmul.mubr.f32.gmra.mxu0 %v84
  %v205 = vpop.f32.mrf.mxu0
  %v206 = vadd.f32 0.0, %v205
  %v207 = vpop.f32.mrf.mxu0
  %208 = vmatprep.mubr.f32.mxu0 0.0
  %209 = vmatmul.mubr.f32.gmra.mxu0 %v87
  %v210 = vpop.f32.mrf.mxu0
  %v211 = vadd.f32 0.0, %v210
  %v212 = vpop.f32.mrf.mxu0
  %213 = vmatprep.mubr.f32.mxu0 0.0
  %214 = vmatmul.mubr.f32.gmra.mxu0 %v90
  %v215 = vpop.f32.mrf.mxu0
  %v216 = vadd.f32 0.0, %v215
  %v217 = vpop.f32.mrf.mxu0
  %218 = vmatprep.mubr.f32.mxu0 0.0
  %219 = vmatmul.mubr.f32.gmra.mxu0 %v93
  %v220 = vpop.f32.mrf.mxu0
  %v221 = vadd.f32 0.0, %v220
  %v222 = vpop.f32.mrf.mxu0
  %223 = vmatprep.mubr.f32.mxu0 0.0
  %224 = vmatmul.mubr.f32.gmra.mxu0 %v96
  %v225 = vpop.f32.mrf.mxu0
  %v226 = vadd.f32 0.0, %v225
  %v227 = vpop.f32.mrf.mxu0
  %228 = vmatprep.mubr.f32.mxu0 0.0
  %229 = vmatmul.mubr.f32.gmra.mxu0 %v99
  %v230 = vpop.f32.mrf.mxu0
  %v231 = vadd.f32 0.0, %v230
  %v232 = vpop.f32.mrf.mxu0
  %233 = vmatprep.mubr.f32.mxu0 0.0
  %234 = vmatmul.mubr.f32.gmra.mxu0 %v102
  %v235 = vpop.f32.mrf.mxu0
  %v236 = vadd.f32 0.0, %v235
  %v237 = vpop.f32.mrf.mxu0
  %238 = vmatprep.mubr.f32.mxu0 0.0
  %239 = vmatmul.mubr.f32.gmra.mxu0 %v105
  %v240 = vpop.f32.mrf.mxu0
  %v241 = vadd.f32 0.0, %v240
  %v242 = vpop.f32.mrf.mxu0
  %243 = vmatprep.mubr.f32.mxu0 0.0
  %244 = vmatmul.mubr.f32.gmra.mxu0 %v108
  %v245 = vpop.f32.mrf.mxu0
  %v246 = vadd.f32 0.0, %v245
  %v247 = vpop.f32.mrf.mxu0
  %248 = vmatprep.mubr.f32.mxu0 0.0
  %249 = vmatmul.mubr.f32.gmra.mxu0 %v111
  %v250 = vpop.f32.mrf.mxu0
  %v251 = vadd.f32 0.0, %v250
  %v252 = vpop.f32.mrf.mxu0
  %253 = vmatprep.mubr.f32.mxu0 0.0
  %254 = vmatmul.mubr.f32.gmra.mxu0 %v114
  %v255 = vpop.f32.mrf.mxu0
  %v256 = vadd.f32 0.0, %v255
  %v257 = vpop.f32.mrf.mxu0
  %258 = vmatprep.mubr.f32.mxu0 0.0
  %259 = vmatmul.mubr.f32.gmra.mxu0 %v117
  %v260 = vpop.f32.mrf.mxu0
  %v261 = vadd.f32 0.0, %v260
  %v262 = vpop.f32.mrf.mxu0
  %263 = vdwg.mxu0
  %v265 = vsel %vm70, %v20, 0
  %v268 = vsel %vm70, %v21, 0
  %v271 = vsel %vm70, %v22, 0
  %v274 = vsel %vm70, %v23, 0
  %v277 = vsel %vm70, %v24, 0
  %v280 = vsel %vm70, %v25, 0
  %v283 = vsel %vm70, %v26, 0
  %v286 = vsel %vm70, %v27, 0
  %v289 = vsel %vm70, %v28, 0
  %v292 = vsel %vm70, %v29, 0
  %v295 = vsel %vm70, %v30, 0
  %v298 = vsel %vm70, %v31, 0
  %v301 = vsel %vm70, %v32, 0
  %v304 = vsel %vm70, %v33, 0
  %v307 = vsel %vm70, %v34, 0
  %v310 = vsel %vm70, %v35, 0
  %312 = vmatprep.subr.mxu0 0.0
  %313 = vmatpush1.msra.mxu0 0.0
  %314 = vmatprep.subr.mxu0 0.0
  %315 = vmatpush1.msra.mxu0 0.0
  %316 = vmatprep.subr.mxu0 0.0
  %317 = vmatpush1.msra.mxu0 0.0
  %318 = vmatprep.subr.mxu0 0.0
  %319 = vmatpush1.msra.mxu0 0.0
  %320 = vmatprep.subr.mxu0 0.0
  %321 = vmatpush1.msra.mxu0 0.0
  %322 = vmatprep.subr.mxu0 0.0
  %323 = vmatpush1.msra.mxu0 0.0
  %324 = vmatprep.subr.mxu0 0.0
  %325 = vmatpush1.msra.mxu0 0.0
  %326 = vmatprep.subr.mxu0 0.0
  %327 = vmatpush1.msra.mxu0 %v44
  %328 = vmatprep.subr.mxu0 0.0
  %329 = vmatpush1.msra.mxu0 %v43
  %330 = vmatprep.subr.mxu0 0.0
  %331 = vmatpush1.msra.mxu0 %v42
  %332 = vmatprep.subr.mxu0 0.0
  %333 = vmatpush1.msra.mxu0 %v41
  %334 = vmatprep.subr.mxu0 0.0
  %335 = vmatpush1.msra.mxu0 %v40
  %336 = vmatprep.subr.mxu0 0.0
  %337 = vmatpush1.msra.mxu0 %v39
  %338 = vmatprep.subr.mxu0 0.0
  %339 = vmatpush1.msra.mxu0 %v38
  %340 = vmatprep.subr.mxu0 0.0
  %341 = vmatpush1.msra.mxu0 %v37
  %342 = vmatprep.subr.mxu0 0.0
  %343 = vmatpush1.msra.mxu0 %v36
  %344 = vmatprep.subr.mxu0 0.0
  %345 = vmatpush2.msra.mxu0 0.0
  %346 = vmatprep.subr.mxu0 0.0
  %347 = vmatpush2.msra.mxu0 0.0
  %348 = vmatprep.subr.mxu0 0.0
  %349 = vmatpush2.msra.mxu0 0.0
  %350 = vmatprep.subr.mxu0 0.0
  %351 = vmatpush2.msra.mxu0 0.0
  %352 = vmatprep.subr.mxu0 0.0
  %353 = vmatpush2.msra.mxu0 0.0
  %354 = vmatprep.subr.mxu0 0.0
  %355 = vmatpush2.msra.mxu0 0.0
  %356 = vmatprep.subr.mxu0 0.0
  %357 = vmatpush2.msra.mxu0 0.0
  %358 = vmatprep.subr.mxu0 0.0
  %359 = vmatpush2.msra.mxu0 0.0
  %360 = vmatprep.subr.mxu0 0.0
  %361 = vmatpush2.msra.mxu0 0.0
  %362 = vmatprep.subr.mxu0 0.0
  %363 = vmatpush2.msra.mxu0 0.0
  %364 = vmatprep.subr.mxu0 0.0
  %365 = vmatpush2.msra.mxu0 0.0
  %366 = vmatprep.subr.mxu0 0.0
  %367 = vmatpush2.msra.mxu0 0.0
  %368 = vmatprep.subr.mxu0 0.0
  %369 = vmatpush2.msra.mxu0 0.0
  %370 = vmatprep.subr.mxu0 0.0
  %371 = vmatpush2.msra.mxu0 0.0
  %372 = vmatprep.subr.mxu0 0.0
  %373 = vmatpush2.msra.mxu0 0.0
  %374 = vmatprep.subr.mxu0 0.0
  %375 = vmatpush2.msra.mxu0 0.0
  %376 = vmatprep.mubr.f32.mxu0 0.0
  %377 = vmatmul.mubr.f32.gmra.mxu0 %v265
  %v378 = vpop.f32.mrf.mxu0
  %v379 = vadd.f32 %v186, %v378
  %v380 = vpop.f32.mrf.mxu0
  %381 = vmatprep.mubr.f32.mxu0 0.0
  %382 = vmatmul.mubr.f32.gmra.mxu0 %v268
  %v383 = vpop.f32.mrf.mxu0
  %v384 = vadd.f32 %v191, %v383
  %v385 = vpop.f32.mrf.mxu0
  %386 = vmatprep.mubr.f32.mxu0 0.0
  %387 = vmatmul.mubr.f32.gmra.mxu0 %v271
  %v388 = vpop.f32.mrf.mxu0
  %v389 = vadd.f32 %v196, %v388
  %v390 = vpop.f32.mrf.mxu0
  %391 = vmatprep.mubr.f32.mxu0 0.0
  %392 = vmatmul.mubr.f32.gmra.mxu0 %v274
  %v393 = vpop.f32.mrf.mxu0
  %v394 = vadd.f32 %v201, %v393
  %v395 = vpop.f32.mrf.mxu0
  %396 = vmatprep.mubr.f32.mxu0 0.0
  %397 = vmatmul.mubr.f32.gmra.mxu0 %v277
  %v398 = vpop.f32.mrf.mxu0
  %v399 = vadd.f32 %v206, %v398
  %v400 = vpop.f32.mrf.mxu0
  %401 = vmatprep.mubr.f32.mxu0 0.0
  %402 = vmatmul.mubr.f32.gmra.mxu0 %v280
  %v403 = vpop.f32.mrf.mxu0
  %v404 = vadd.f32 %v211, %v403
  %v405 = vpop.f32.mrf.mxu0
  %406 = vmatprep.mubr.f32.mxu0 0.0
  %407 = vmatmul.mubr.f32.gmra.mxu0 %v283
  %v408 = vpop.f32.mrf.mxu0
  %v409 = vadd.f32 %v216, %v408
  %v410 = vpop.f32.mrf.mxu0
  %411 = vmatprep.mubr.f32.mxu0 0.0
  %412 = vmatmul.mubr.f32.gmra.mxu0 %v286
  %v413 = vpop.f32.mrf.mxu0
  %v414 = vadd.f32 %v221, %v413
  %v415 = vpop.f32.mrf.mxu0
  %416 = vmatprep.mubr.f32.mxu0 0.0
  %417 = vmatmul.mubr.f32.gmra.mxu0 %v289
  %v418 = vpop.f32.mrf.mxu0
  %v419 = vadd.f32 %v226, %v418
  %v420 = vpop.f32.mrf.mxu0
  %421 = vmatprep.mubr.f32.mxu0 0.0
  %422 = vmatmul.mubr.f32.gmra.mxu0 %v292
  %v423 = vpop.f32.mrf.mxu0
  %v424 = vadd.f32 %v231, %v423
  %v425 = vpop.f32.mrf.mxu0
  %426 = vmatprep.mubr.f32.mxu0 0.0
  %427 = vmatmul.mubr.f32.gmra.mxu0 %v295
  %v428 = vpop.f32.mrf.mxu0
  %v429 = vadd.f32 %v236, %v428
  %v430 = vpop.f32.mrf.mxu0
  %431 = vmatprep.mubr.f32.mxu0 0.0
  %432 = vmatmul.mubr.f32.gmra.mxu0 %v298
  %v433 = vpop.f32.mrf.mxu0
  %v434 = vadd.f32 %v241, %v433
  %v435 = vpop.f32.mrf.mxu0
  %436 = vmatprep.mubr.f32.mxu0 0.0
  %437 = vmatmul.mubr.f32.gmra.mxu0 %v301
  %v438 = vpop.f32.mrf.mxu0
  %v439 = vadd.f32 %v246, %v438
  %v440 = vpop.f32.mrf.mxu0
  %441 = vmatprep.mubr.f32.mxu0 0.0
  %442 = vmatmul.mubr.f32.gmra.mxu0 %v304
  %v443 = vpop.f32.mrf.mxu0
  %v444 = vadd.f32 %v251, %v443
  %v445 = vpop.f32.mrf.mxu0
  %446 = vmatprep.mubr.f32.mxu0 0.0
  %447 = vmatmul.mubr.f32.gmra.mxu0 %v307
  %v448 = vpop.f32.mrf.mxu0
  %v449 = vadd.f32 %v256, %v448
  %v450 = vpop.f32.mrf.mxu0
  %451 = vmatprep.mubr.f32.mxu0 0.0
  %452 = vmatmul.mubr.f32.gmra.mxu0 %v310
  %v453 = vpop.f32.mrf.mxu0
  %v454 = vadd.f32 %v261, %v453
  %v455 = vpop.f32.mrf.mxu0
  %456 = vdwg.mxu0
  %v457 = vld [vmem:[%s4] sm:$0x1]
  %v459 = vlaneseq
  %v460 = vshrl.u32 %v459, 7
  %v461 = vsub.s32 0, %v460
  %v462 = vrot.slane %v457, %v461
  %v464 = vadd.f32 %v379, %v462
  %v465 = vadd.f32 %v384, %v462
  %v466 = vadd.f32 %v389, %v462
  %v467 = vadd.f32 %v394, %v462
  %v468 = vadd.f32 %v399, %v462
  %v469 = vadd.f32 %v404, %v462
  %v470 = vadd.f32 %v409, %v462
  %v471 = vadd.f32 %v414, %v462
  %v472 = vadd.f32 %v419, %v462
  %v473 = vadd.f32 %v424, %v462
  %v474 = vadd.f32 %v429, %v462
  %v475 = vadd.f32 %v434, %v462
  %v476 = vadd.f32 %v439, %v462
  %v477 = vadd.f32 %v444, %v462
  %v478 = vadd.f32 %v449, %v462
  %v479 = vadd.f32 %v454, %v462
  %v480 = vtanh.pop %v464
  %v481 = vtanh.pop %v465
  %v482 = vtanh.pop %v466
  %v483 = vtanh.pop %v467
  %v484 = vtanh.pop %v468
  %v485 = vtanh.pop %v469
  %v486 = vtanh.pop %v470
  %v487 = vtanh.pop %v471
  %v488 = vtanh.pop %v472
  %v489 = vtanh.pop %v473
  %v490 = vtanh.pop %v474
  %v491 = vtanh.pop %v475
  %v492 = vtanh.pop %v476
  %v493 = vtanh.pop %v477
  %v494 = vtanh.pop %v478
  %v495 = vtanh.pop %v479
  %vm496 = vcmask 97280
  %497 = vst.msk [vmem:[%s5] sm:$0xff] %vm496, %v480
  %498 = vst.msk [vmem:[%s5 + $0x8] sm:$0xff] %vm496, %v481
  %499 = vst.msk [vmem:[%s5 + $0x10] sm:$0xff] %vm496, %v482
  %500 = vst.msk [vmem:[%s5 + $0x18] sm:$0xff] %vm496, %v483
  %501 = vst.msk [vmem:[%s5 + $0x20] sm:$0xff] %vm496, %v484
  %502 = vst.msk [vmem:[%s5 + $0x28] sm:$0xff] %vm496, %v485
  %503 = vst.msk [vmem:[%s5 + $0x30] sm:$0xff] %vm496, %v486
  %504 = vst.msk [vmem:[%s5 + $0x38] sm:$0xff] %vm496, %v487
  %505 = vst.msk [vmem:[%s5 + $0x40] sm:$0xff] %vm496, %v488
  %506 = vst.msk [vmem:[%s5 + $0x48] sm:$0xff] %vm496, %v489
  %507 = vst.msk [vmem:[%s5 + $0x50] sm:$0xff] %vm496, %v490
  %508 = vst.msk [vmem:[%s5 + $0x58] sm:$0xff] %vm496, %v491
  %509 = vst.msk [vmem:[%s5 + $0x60] sm:$0xff] %vm496, %v492
  %510 = vst.msk [vmem:[%s5 + $0x68] sm:$0xff] %vm496, %v493
  %511 = vst.msk [vmem:[%s5 + $0x70] sm:$0xff] %vm496, %v494
  %512 = vst.msk [vmem:[%s5 + $0x78] sm:$0xff] %vm496, %v495
  // Predicated region
  $region22: #{_lambda_.11} parent=0 // pred_check
    _
  $region23: #{_lambda_.11} parent=0 // pred_check_branch
    %514 = sbr.rel (0) target = $region25
  $region24: #{_lambda_.11} parent=0 // pred_region
    _
  $region25: #{_lambda_.11} parent=0 // pred_fallthru
    _
  // Predicated region
  $region26: #{_lambda_.11} parent=0 // pred_check
    _
  $region27: #{_lambda_.11} parent=0 // pred_check_branch
    %516 = sbr.rel (0) target = $region29
  $region28: #{_lambda_.11} parent=0 // pred_region
    _
  $region29: #{_lambda_.11} parent=0 // pred_fallthru
    _

</llo_original>
